<compile_context>
chip_gen: v7x
topology: tpu7x:2x2x1
jax: 0.10.0
libtpu: 0.0.40
codegen_flags: <defaults>
</compile_context>

<pallas_src>
import jax
import jax.numpy as jnp
from jax import lax
from jax.experimental import pallas as pl
from jax.experimental.pallas import tpu as pltpu

BN_EPS = 1e-5


def _has_bf16_eup():
    """tanh runs on the EUP; v6e/v7x have a bf16 EUP path, v5e/older do not."""
    try:
        kind = jax.devices()[0].device_kind.lower()
    except Exception:
        return False
    return not any(t in kind for t in ("v2", "v3", "v4", "v5"))


_TANH_BF16 = _has_bf16_eup()


def _tanh(v):
    """tanh of an f32 value, evaluated in bf16 where the EUP supports it."""
    if _TANH_BF16:
        return jnp.tanh(v.astype(jnp.bfloat16))
    return jnp.tanh(v)


# --------------------------------------------------------------------------- #
# Kernels
# --------------------------------------------------------------------------- #
def _conv3x3_rows(up, mid, dn, t_ref):
    """3x3 conv as three accumulating MXU matmuls (one per ky tap).

    up/mid/dn : (rows, W*C) bf16 input rows shifted by ky-1 (zero rows at the
                image boundaries are supplied by the caller's padding).
    t_ref     : (3, W*Cin, W*Cout) bf16 row-Toeplitz slabs (kx taps and the
                width zero-padding folded in).  Returns f32 (rows, W*Cout).
    """
    acc = jnp.dot(up, t_ref[0], preferred_element_type=jnp.float32)
    acc = acc + jnp.dot(mid, t_ref[1], preferred_element_type=jnp.float32)
    acc = acc + jnp.dot(dn, t_ref[2], preferred_element_type=jnp.float32)
    return acc


def _col_stats(acc):
    """Per-lane (sum, sum_sq) over the block's rows -> (1, 2, W*Cout) f32."""
    colsum = jnp.sum(acc, axis=0, keepdims=True)
    colsq = jnp.sum(acc * acc, axis=0, keepdims=True)
    return jnp.concatenate([colsum, colsq], axis=0)[None, :, :]


def _conv_stats_kernel(x_ref, t_ref, y_ref, stats_ref):
    """conv1 on a block of whole images + partial BN1 statistics.

    x_ref     : (bi, H+2, W*Cin)   bf16  one zero row above/below each image
    t_ref     : (3, W*Cin, W*Cout) bf16  VMEM-resident (constant index map)
    y_ref     : (bi, H, W*Cout)    bf16  raw conv output (pre-BN)
    stats_ref : (1, 2, W*Cout)     f32   per-block (sum, sum_sq)
    """
    bi, hp2, wci = x_ref.shape
    h = hp2 - 2
    rows = bi * h
    up = x_ref[:, 0:h, :].reshape(rows, wci)        # input row h-1 (zero at top)
    mid = x_ref[:, 1:h + 1, :].reshape(rows, wci)   # input row h
    dn = x_ref[:, 2:h + 2, :].reshape(rows, wci)    # input row h+1 (zero at bot)
    acc = _conv3x3_rows(up, mid, dn, t_ref)
    y_ref[...] = acc.reshape(bi, h, -1).astype(y_ref.dtype)
    stats_ref[...] = _col_stats(acc)


def _bn_tanh_conv_stats_kernel(y_ref, sc_ref, sh_ref, t_ref,
                               y2_ref, stats_ref, zbuf):
    """BN1-affine + tanh, then conv2 + partial BN2 statistics, on one block.

    y_ref   : (bi, H, W*Cout)     bf16 raw conv1 output
    sc/sh   : (1, W*Cout)         f32  BN1 scale/shift tiled to (w, c) lanes
    t_ref   : (3, W*Cout, W*Cout) bf16 conv2 Toeplitz slabs (resident)
    zbuf    : (bi, H+2, W*Cout)   bf16 VMEM scratch: activation + zero halos
    """
    bi, hp2, wc = zbuf.shape
    h = hp2 - 2
    rows = bi * h
    v = y_ref[...].astype(jnp.float32) * sc_ref[...] + sh_ref[...]
    z = _tanh(v).astype(jnp.bfloat16)               # (bi, h, wc)
    # Stage-2 halos: store the activation with one zero row above/below each
    # image; the ky shifts then become plain slice reads (no rolls / masks).
    zero_row = jnp.zeros((bi, 1, wc), jnp.bfloat16)
    zbuf[:, 0:1, :] = zero_row
    zbuf[:, h + 1:h + 2, :] = zero_row
    zbuf[:, 1:h + 1, :] = z
    up = zbuf[:, 0:h, :].reshape(rows, wc)
    dn = zbuf[:, 2:h + 2, :].reshape(rows, wc)
    mid = z.reshape(rows, wc)
    acc = _conv3x3_rows(up, mid, dn, t_ref)
    y2_ref[...] = acc.reshape(bi, h, wc).astype(y2_ref.dtype)
    stats_ref[...] = _col_stats(acc)


def _bn_tanh_kernel(y_ref, sc_ref, sh_ref, o_ref):
    """Final BN2-affine + tanh (elementwise), lane-dense f32 store."""
    v = y_ref[...].astype(jnp.float32) * sc_ref[...] + sh_ref[...]
    o_ref[...] = _tanh(v).astype(o_ref.dtype)


# --------------------------------------------------------------------------- #
# Wrapper helpers
# --------------------------------------------------------------------------- #
def _row_toeplitz(w_oihw, W):
    """(Cout, Cin, 3, 3) conv weight -> (3, W*Cin, W*Cout) row-Toeplitz slabs.

    Slab ky maps an input row (lanes flattened over (w, ci)) to an output row
    (lanes flattened over (w, co)); out-of-range kx entries stay zero, which
    realises the width zero-padding.  out_row[h] = sum_ky row[h+ky-1] @ T[ky].
    """
    Cout, Cin, KH, KW = w_oihw.shape
    wt = jnp.transpose(w_oihw, (2, 3, 1, 0))            # (ky, kx, Cin, Cout)
    T = jnp.zeros((KH, W * Cin, W * Cout), jnp.float32)
    for kx in range(KW):
        for wo in range(W):
            wi = wo + kx - 1
            if 0 <= wi < W:
                T = T.at[:, wi * Cin:(wi + 1) * Cin,
                         wo * Cout:(wo + 1) * Cout].set(wt[:, kx])
    return T.astype(jnp.bfloat16)


def _pick_block_images(N, H, target_rows=256):
    """Images per grid block: aim for >=256 MXU M rows (v6e/v7x guidance) but
    keep at least 2 grid steps when N > 1 so pipelining / v7x megacore have
    independent work; must divide N evenly."""
    cand = max(1, min(N, target_rows // max(H, 1)))
    if N > 1:
        cand = min(cand, max(1, N // 2))
    while N % cand:
        cand -= 1
    return cand


def _compiler_params(block_bytes, resident_bytes):
    """Derive vmem_limit from the real working set, capped per-generation."""
    try:
        vmem_cap = pltpu.get_tpu_info().vmem_capacity_bytes
    except Exception:
        vmem_cap = 64 * 1024 * 1024          # conservative (v7x-sized) fallback
    needed = 2 * block_bytes + resident_bytes + (4 << 20)   # x2: double buffer
    limit = min(int(vmem_cap * 3 // 4), max(32 * 1024 * 1024, int(needed)))
    return pltpu.CompilerParams(
        dimension_semantics=("parallel",),   # image blocks are independent
        vmem_limit_bytes=limit)


def _bn_affine(stats, count, gamma, beta, W):
    """Per-block (sum, sum_sq) partials -> per-lane BN scale/shift (1, W*C)."""
    cout = gamma.shape[0]
    s = jnp.sum(stats.reshape(-1, 2, W, cout), axis=(0, 2))     # (2, Cout)
    mean = s[0] / count
    var = jnp.maximum(s[1] / count - mean * mean, 0.0)          # clamp 1-pass var
    scale = gamma * lax.rsqrt(var + BN_EPS)
    shift = beta - mean * scale
    # Broadcast the per-channel affine back onto the (w, c) lane packing.
    return jnp.tile(scale, W)[None, :], jnp.tile(shift, W)[None, :]


# --------------------------------------------------------------------------- #
# Forward pass
# --------------------------------------------------------------------------- #
@jax.jit
def conv_block_forward(x_nchw, params):
    N, Cin, H, W = x_nchw.shape
    Cout = params["w1"].shape[0]
    WCi, WCo = W * Cin, W * Cout
    bi = _pick_block_images(N, H)
    nb = N // bi
    count = float(N * H * W)

    # NCHW -> per-image rows, lane axis = flattened (w, c), cast straight to
    # bf16 (the MXU operand dtype) and zero-pad one row above/below each image
    # so the kernels read conv halos as plain shifted slices.  XLA fuses the
    # transpose/cast/pad into a single pass.
    x_rows = jnp.transpose(x_nchw, (0, 2, 3, 1)).astype(jnp.bfloat16)
    x_pad = jnp.pad(x_rows.reshape(N, H, WCi), ((0, 0), (1, 1), (0, 0)))

    t1 = _row_toeplitz(params["w1"], W)                 # (3, WCi, WCo) bf16
    t2 = _row_toeplitz(params["w2"], W)                 # (3, WCo, WCo) bf16

    # ---- call A: conv1 + per-block BN1 statistics --------------------------
    y1, stats1 = pl.pallas_call(
        _conv_stats_kernel,
        grid=(nb,),
        in_specs=[
            pl.BlockSpec((bi, H + 2, WCi), lambda i: (i, 0, 0)),
            pl.BlockSpec((3, WCi, WCo), lambda i: (0, 0, 0)),   # resident
        ],
        out_specs=[
            pl.BlockSpec((bi, H, WCo), lambda i: (i, 0, 0)),
            pl.BlockSpec((1, 2, WCo), lambda i: (i, 0, 0)),
        ],
        out_shape=[
            jax.ShapeDtypeStruct((N, H, WCo), jnp.bfloat16),
            jax.ShapeDtypeStruct((nb, 2, WCo), jnp.float32),
        ],
        compiler_params=_compiler_params(
            block_bytes=bi * (H + 2) * WCi * 2 + bi * H * WCo * 2 + 2 * WCo * 4,
            resident_bytes=t1.size * 2),
        cost_estimate=pl.CostEstimate(
            flops=2 * N * H * 3 * WCi * WCo,
            transcendentals=0,
            bytes_accessed=x_pad.size * 2 + t1.size * 2
            + N * H * WCo * 2 + nb * 2 * WCo * 4),
    )(x_pad, t1)

    sc1, sh1 = _bn_affine(stats1, count, params["g1"], params["beta1"], W)

    # ---- call B: BN1 + tanh + conv2 + per-block BN2 statistics --------------
    y2, stats2 = pl.pallas_call(
        _bn_tanh_conv_stats_kernel,
        grid=(nb,),
        in_specs=[
            pl.BlockSpec((bi, H, WCo), lambda i: (i, 0, 0)),
            pl.BlockSpec((1, WCo), lambda i: (0, 0)),           # resident
            pl.BlockSpec((1, WCo), lambda i: (0, 0)),           # resident
            pl.BlockSpec((3, WCo, WCo), lambda i: (0, 0, 0)),   # resident
        ],
        out_specs=[
            pl.BlockSpec((bi, H, WCo), lambda i: (i, 0, 0)),
            pl.BlockSpec((1, 2, WCo), lambda i: (i, 0, 0)),
        ],
        out_shape=[
            jax.ShapeDtypeStruct((N, H, WCo), jnp.bfloat16),
            jax.ShapeDtypeStruct((nb, 2, WCo), jnp.float32),
        ],
        scratch_shapes=[pltpu.VMEM((bi, H + 2, WCo), jnp.bfloat16)],
        compiler_params=_compiler_params(
            block_bytes=2 * bi * H * WCo * 2 + 2 * WCo * 4,
            resident_bytes=t2.size * 2 + 2 * WCo * 4 + bi * (H + 2) * WCo * 2),
        cost_estimate=pl.CostEstimate(
            flops=2 * N * H * 3 * WCo * WCo,
            transcendentals=N * H * WCo,
            bytes_accessed=2 * N * H * WCo * 2 + t2.size * 2
            + nb * 2 * WCo * 4 + 2 * WCo * 4 * 2),
    )(y1, sc1, sh1, t2)

    sc2, sh2 = _bn_affine(stats2, count, params["g2"], params["beta2"], W)

    # ---- call C: BN2 + tanh --------------------------------------------------
    out_rows = pl.pallas_call(
        _bn_tanh_kernel,
        grid=(nb,),
        in_specs=[
            pl.BlockSpec((bi, H, WCo), lambda i: (i, 0, 0)),
            pl.BlockSpec((1, WCo), lambda i: (0, 0)),
            pl.BlockSpec((1, WCo), lambda i: (0, 0)),
        ],
        out_specs=pl.BlockSpec((bi, H, WCo), lambda i: (i, 0, 0)),
        out_shape=jax.ShapeDtypeStruct((N, H, WCo), jnp.float32),
        compiler_params=_compiler_params(
            block_bytes=bi * H * WCo * (2 + 4),
            resident_bytes=2 * WCo * 4),
        cost_estimate=pl.CostEstimate(
            flops=2 * N * H * WCo,
            transcendentals=N * H * WCo,
            bytes_accessed=N * H * WCo * (2 + 4) + 2 * WCo * 4 * 2),
    )(y2, sc2, sh2)

    # Caller / reference expect NCHW f32 (keep the transpose; drop it when the
    # consumer can take NHWC / bf16 directly).
    return jnp.transpose(out_rows.reshape(N, H, W, Cout), (0, 3, 1, 2))


# --------------------------------------------------------------------------- #
# Params, reference, self-test
# --------------------------------------------------------------------------- #
def init_params(key, in_c, out_c):
    """Deterministic init matching PyTorch Conv2d/BatchNorm2d shapes."""
    k1, k2, k3, k4 = jax.random.split(key, 4)
    bound1 = 1.0 / jnp.sqrt(in_c * 9.0)
    bound2 = 1.0 / jnp.sqrt(out_c * 9.0)
    return {
        "w1": jax.random.uniform(k1, (out_c, in_c, 3, 3), jnp.float32,
                                 -bound1, bound1),
        "b1": jax.random.uniform(k2, (out_c,), jnp.float32, -bound1, bound1),
        "g1": jnp.ones((out_c,), jnp.float32),
        "beta1": jnp.zeros((out_c,), jnp.float32),
        "w2": jax.random.uniform(k3, (out_c, out_c, 3, 3), jnp.float32,
                                 -bound2, bound2),
        "b2": jax.random.uniform(k4, (out_c,), jnp.float32, -bound2, bound2),
        "g2": jnp.ones((out_c,), jnp.float32),
        "beta2": jnp.zeros((out_c,), jnp.float32),
    }


def _reference_forward(x_nchw, params):
    """Plain-JAX f32 reference (lax.conv) for the correctness cross-check."""
    def stage(x, w, b, g, beta):
        y = lax.conv_general_dilated(
            x, w, window_strides=(1, 1), padding=((1, 1), (1, 1)),
            dimension_numbers=("NCHW", "OIHW", "NCHW"))
        y = y + b[None, :, None, None]
        mean = jnp.mean(y, axis=(0, 2, 3), keepdims=True)
        var = jnp.mean(jnp.square(y - mean), axis=(0, 2, 3), keepdims=True)
        y = (y - mean) * lax.rsqrt(var + BN_EPS)
        y = y * g[None, :, None, None] + beta[None, :, None, None]
        return jnp.tanh(y)

    y = stage(x_nchw.astype(jnp.float32), params["w1"], params["b1"],
              params["g1"], params["beta1"])
    y = stage(y, params["w2"], params["b2"], params["g2"], params["beta2"])
    return y


if __name__ == "__main__":
    key = jax.random.PRNGKey(0)
    kx, kp = jax.random.split(key)

    N, in_c, out_c, H, W = 2, 4, 8, 16, 16
    x = jax.random.normal(kx, (N, in_c, H, W), jnp.float32)
    params = init_params(kp, in_c, out_c)

    out = jax.block_until_ready(conv_block_forward(x, params))
    ref = jax.block_until_ready(_reference_forward(x, params))

    assert out.shape == (N, out_c, H, W)
    # bf16 MXU operands / bf16 intermediates / bf16 tanh (on v6e+) vs. the f32
    # reference through two BN-normalised stages: observed max error O(1e-2).
    err = float(jnp.max(jnp.abs(out - ref)))
    assert err < 4e-2, f"mismatch vs reference: {err}"

    print("KERNEL_OK")
</pallas_src>

<mosaic_0001>
module attributes {stable_mosaic.version = 11 : i64} {
  func.func @_conv_stats_kernel(%arg0: i32, %arg1: memref<1x18x64xbf16, #tpu.memory_space<vmem>>, %arg2: memref<3x64x128xbf16, #tpu.memory_space<vmem>>, %arg3: memref<1x16x128xbf16, #tpu.memory_space<vmem>>, %arg4: memref<1x2x128xf32, #tpu.memory_space<vmem>>) attributes {dimension_semantics = [#tpu.dimension_semantics<parallel>], iteration_bounds = array<i64: 2>, scalar_prefetch = 0 : i64, scratch_operands = 0 : i64, tpu.core_type = #tpu.core_type<tc>, window_params = [{transform_indices = @transform_0, window_bounds = array<i64: 1, 18, 64>}, {pipeline_mode = #tpu.pipeline_mode<synchronous>, transform_indices = @transform_1, window_bounds = array<i64: 3, 64, 128>}, {transform_indices = @transform_2, window_bounds = array<i64: 1, 16, 128>}, {transform_indices = @transform_3, window_bounds = array<i64: 1, 2, 128>}]} {
    %c0 = arith.constant 0 : index
    %c0_0 = arith.constant 0 : index
    %c0_1 = arith.constant 0 : index
    %0 = vector.load %arg1[%c0, %c0_0, %c0_1] : memref<1x18x64xbf16, #tpu.memory_space<vmem>>, vector<1x16x64xbf16>
    %1 = vector.shape_cast %0 : vector<1x16x64xbf16> to vector<16x64xbf16>
    %c0_2 = arith.constant 0 : index
    %c1 = arith.constant 1 : index
    %c0_3 = arith.constant 0 : index
    %2 = vector.load %arg1[%c0_2, %c1, %c0_3] : memref<1x18x64xbf16, #tpu.memory_space<vmem>>, vector<1x16x64xbf16>
    %3 = vector.shape_cast %2 : vector<1x16x64xbf16> to vector<16x64xbf16>
    %c0_4 = arith.constant 0 : index
    %c2 = arith.constant 2 : index
    %c0_5 = arith.constant 0 : index
    %4 = vector.load %arg1[%c0_4, %c2, %c0_5] : memref<1x18x64xbf16, #tpu.memory_space<vmem>>, vector<1x16x64xbf16>
    %5 = vector.shape_cast %4 : vector<1x16x64xbf16> to vector<16x64xbf16>
    %c0_6 = arith.constant 0 : index
    %c0_7 = arith.constant 0 : index
    %c0_8 = arith.constant 0 : index
    %6 = vector.load %arg2[%c0_6, %c0_7, %c0_8] : memref<3x64x128xbf16, #tpu.memory_space<vmem>>, vector<1x64x128xbf16>
    %7 = vector.shape_cast %6 : vector<1x64x128xbf16> to vector<64x128xbf16>
    %cst = arith.constant dense<0.000000e+00> : vector<16x128xf32>
    %8 = tpu.matmul %1, %7, %cst {dimension_numbers = #tpu.dot_dimension_numbers<[1], [0], [0], [1], [0, 0, 1, 1], [], []>} : vector<16x64xbf16>, vector<64x128xbf16>, vector<16x128xf32> -> vector<16x128xf32>
    %c1_9 = arith.constant 1 : index
    %c0_10 = arith.constant 0 : index
    %c0_11 = arith.constant 0 : index
    %9 = vector.load %arg2[%c1_9, %c0_10, %c0_11] : memref<3x64x128xbf16, #tpu.memory_space<vmem>>, vector<1x64x128xbf16>
    %10 = vector.shape_cast %9 : vector<1x64x128xbf16> to vector<64x128xbf16>
    %cst_12 = arith.constant dense<0.000000e+00> : vector<16x128xf32>
    %11 = tpu.matmul %3, %10, %cst_12 {dimension_numbers = #tpu.dot_dimension_numbers<[1], [0], [0], [1], [0, 0, 1, 1], [], []>} : vector<16x64xbf16>, vector<64x128xbf16>, vector<16x128xf32> -> vector<16x128xf32>
    %12 = arith.addf %8, %11 : vector<16x128xf32>
    %c2_13 = arith.constant 2 : index
    %c0_14 = arith.constant 0 : index
    %c0_15 = arith.constant 0 : index
    %13 = vector.load %arg2[%c2_13, %c0_14, %c0_15] : memref<3x64x128xbf16, #tpu.memory_space<vmem>>, vector<1x64x128xbf16>
    %14 = vector.shape_cast %13 : vector<1x64x128xbf16> to vector<64x128xbf16>
    %cst_16 = arith.constant dense<0.000000e+00> : vector<16x128xf32>
    %15 = tpu.matmul %5, %14, %cst_16 {dimension_numbers = #tpu.dot_dimension_numbers<[1], [0], [0], [1], [0, 0, 1, 1], [], []>} : vector<16x64xbf16>, vector<64x128xbf16>, vector<16x128xf32> -> vector<16x128xf32>
    %16 = arith.addf %12, %15 : vector<16x128xf32>
    %17 = vector.shape_cast %16 : vector<16x128xf32> to vector<1x16x128xf32>
    %18 = arith.truncf %17 : vector<1x16x128xf32> to vector<1x16x128xbf16>
    %c0_17 = arith.constant 0 : index
    %c0_18 = arith.constant 0 : index
    %c0_19 = arith.constant 0 : index
    %19 = vector.load %arg3[%c0_17, %c0_18, %c0_19] : memref<1x16x128xbf16, #tpu.memory_space<vmem>>, vector<1x16x128xbf16>
    tpu.vector_store %arg3[%c0_17, %c0_18, %c0_19], %18 {strides = array<i32>} : memref<1x16x128xbf16, #tpu.memory_space<vmem>>, vector<1x16x128xbf16>,
    %cst_20 = arith.constant dense<0.000000e+00> : vector<128xf32>
    %20 = vector.multi_reduction <add>, %16, %cst_20 [0] : vector<16x128xf32> to vector<128xf32>
    %21 = vector.shape_cast %20 : vector<128xf32> to vector<1x128xf32>
    %22 = arith.mulf %16, %16 : vector<16x128xf32>
    %cst_21 = arith.constant dense<0.000000e+00> : vector<128xf32>
    %23 = vector.multi_reduction <add>, %22, %cst_21 [0] : vector<16x128xf32> to vector<128xf32>
    %24 = vector.shape_cast %23 : vector<128xf32> to vector<1x128xf32>
    %25 = tpu.concatenate %21, %24 in 0 : vector<1x128xf32>, vector<1x128xf32> -> vector<2x128xf32>
    %26 = vector.shape_cast %25 : vector<2x128xf32> to vector<1x2x128xf32>
    %c0_22 = arith.constant 0 : index
    %c0_23 = arith.constant 0 : index
    %c0_24 = arith.constant 0 : index
    %27 = vector.load %arg4[%c0_22, %c0_23, %c0_24] : memref<1x2x128xf32, #tpu.memory_space<vmem>>, vector<1x2x128xf32>
    tpu.vector_store %arg4[%c0_22, %c0_23, %c0_24], %26 {strides = array<i32>} : memref<1x2x128xf32, #tpu.memory_space<vmem>>, vector<1x2x128xf32>,
    return
  }
  func.func @transform_0(%arg0: i32) -> (i32, i32, i32) {
    %c0_i32 = arith.constant 0 : i32
    %c0_i32_0 = arith.constant 0 : i32
    %c0_i32_1 = arith.constant 0 : i32
    return %arg0, %c0_i32, %c0_i32_0 : i32, i32, i32
  }
  func.func @transform_1(%arg0: i32) -> (i32, i32, i32) {
    %c0_i32 = arith.constant 0 : i32
    %c0_i32_0 = arith.constant 0 : i32
    %c0_i32_1 = arith.constant 0 : i32
    %c0_i32_2 = arith.constant 0 : i32
    return %c0_i32, %c0_i32_0, %c0_i32_1 : i32, i32, i32
  }
  func.func @transform_2(%arg0: i32) -> (i32, i32, i32) {
    %c0_i32 = arith.constant 0 : i32
    %c0_i32_0 = arith.constant 0 : i32
    %c0_i32_1 = arith.constant 0 : i32
    return %arg0, %c0_i32, %c0_i32_0 : i32, i32, i32
  }
  func.func @transform_3(%arg0: i32) -> (i32, i32, i32) {
    %c0_i32 = arith.constant 0 : i32
    %c0_i32_0 = arith.constant 0 : i32
    %c0_i32_1 = arith.constant 0 : i32
    return %arg0, %c0_i32, %c0_i32_0 : i32, i32, i32
  }
}

module attributes {stable_mosaic.version = 11 : i64} {
  func.func @_bn_tanh_conv_stats_kernel(%arg0: i32, %arg1: memref<1x16x128xbf16, #tpu.memory_space<vmem>>, %arg2: memref<1x128xf32, #tpu.memory_space<vmem>>, %arg3: memref<1x128xf32, #tpu.memory_space<vmem>>, %arg4: memref<3x128x128xbf16, #tpu.memory_space<vmem>>, %arg5: memref<1x16x128xbf16, #tpu.memory_space<vmem>>, %arg6: memref<1x2x128xf32, #tpu.memory_space<vmem>>, %arg7: memref<1x18x128xbf16, #tpu.memory_space<vmem>>) attributes {dimension_semantics = [#tpu.dimension_semantics<parallel>], iteration_bounds = array<i64: 2>, scalar_prefetch = 0 : i64, scratch_operands = 1 : i64, tpu.core_type = #tpu.core_type<tc>, window_params = [{transform_indices = @transform_0, window_bounds = array<i64: 1, 16, 128>}, {pipeline_mode = #tpu.pipeline_mode<synchronous>, transform_indices = @transform_1, window_bounds = array<i64: 1, 128>}, {pipeline_mode = #tpu.pipeline_mode<synchronous>, transform_indices = @transform_2, window_bounds = array<i64: 1, 128>}, {pipeline_mode = #tpu.pipeline_mode<synchronous>, transform_indices = @transform_3, window_bounds = array<i64: 3, 128, 128>}, {transform_indices = @transform_4, window_bounds = array<i64: 1, 16, 128>}, {transform_indices = @transform_5, window_bounds = array<i64: 1, 2, 128>}]} {
    %c0 = arith.constant 0 : index
    %c0_0 = arith.constant 0 : index
    %c0_1 = arith.constant 0 : index
    %0 = vector.load %arg1[%c0, %c0_0, %c0_1] : memref<1x16x128xbf16, #tpu.memory_space<vmem>>, vector<1x16x128xbf16>
    %1 = arith.extf %0 : vector<1x16x128xbf16> to vector<1x16x128xf32>
    %c0_2 = arith.constant 0 : index
    %c0_3 = arith.constant 0 : index
    %2 = vector.load %arg2[%c0_2, %c0_3] : memref<1x128xf32, #tpu.memory_space<vmem>>, vector<1x128xf32>
    %3 = vector.shape_cast %2 : vector<1x128xf32> to vector<1x1x128xf32>
    %4 = vector.broadcast %3 : vector<1x1x128xf32> to vector<1x16x128xf32>
    %5 = arith.mulf %1, %4 : vector<1x16x128xf32>
    %c0_4 = arith.constant 0 : index
    %c0_5 = arith.constant 0 : index
    %6 = vector.load %arg3[%c0_4, %c0_5] : memref<1x128xf32, #tpu.memory_space<vmem>>, vector<1x128xf32>
    %7 = vector.shape_cast %6 : vector<1x128xf32> to vector<1x1x128xf32>
    %8 = vector.broadcast %7 : vector<1x1x128xf32> to vector<1x16x128xf32>
    %9 = arith.addf %5, %8 : vector<1x16x128xf32>
    %10 = arith.truncf %9 : vector<1x16x128xf32> to vector<1x16x128xbf16>
    %11 = math.tanh %10 : vector<1x16x128xbf16>
    %cst = arith.constant 0.000000e+00 : bf16
    %12 = vector.broadcast %cst : bf16 to vector<1x1x128xbf16>
    %c0_6 = arith.constant 0 : index
    %c0_7 = arith.constant 0 : index
    %c0_8 = arith.constant 0 : index
    %13 = vector.load %arg7[%c0_6, %c0_7, %c0_8] : memref<1x18x128xbf16, #tpu.memory_space<vmem>>, vector<1x1x128xbf16>
    tpu.vector_store %arg7[%c0_6, %c0_7, %c0_8], %12 {strides = array<i32>} : memref<1x18x128xbf16, #tpu.memory_space<vmem>>, vector<1x1x128xbf16>,
    %c0_9 = arith.constant 0 : index
    %c17 = arith.constant 17 : index
    %c0_10 = arith.constant 0 : index
    %14 = vector.load %arg7[%c0_9, %c17, %c0_10] : memref<1x18x128xbf16, #tpu.memory_space<vmem>>, vector<1x1x128xbf16>
    tpu.vector_store %arg7[%c0_9, %c17, %c0_10], %12 {strides = array<i32>} : memref<1x18x128xbf16, #tpu.memory_space<vmem>>, vector<1x1x128xbf16>,
    %c0_11 = arith.constant 0 : index
    %c1 = arith.constant 1 : index
    %c0_12 = arith.constant 0 : index
    %15 = vector.load %arg7[%c0_11, %c1, %c0_12] : memref<1x18x128xbf16, #tpu.memory_space<vmem>>, vector<1x16x128xbf16>
    tpu.vector_store %arg7[%c0_11, %c1, %c0_12], %11 {strides = array<i32>} : memref<1x18x128xbf16, #tpu.memory_space<vmem>>, vector<1x16x128xbf16>,
    %c0_13 = arith.constant 0 : index
    %c0_14 = arith.constant 0 : index
    %c0_15 = arith.constant 0 : index
    %16 = vector.load %arg7[%c0_13, %c0_14, %c0_15] : memref<1x18x128xbf16, #tpu.memory_space<vmem>>, vector<1x16x128xbf16>
    %17 = vector.shape_cast %16 : vector<1x16x128xbf16> to vector<16x128xbf16>
    %c0_16 = arith.constant 0 : index
    %c2 = arith.constant 2 : index
    %c0_17 = arith.constant 0 : index
    %18 = vector.load %arg7[%c0_16, %c2, %c0_17] : memref<1x18x128xbf16, #tpu.memory_space<vmem>>, vector<1x16x128xbf16>
    %19 = vector.shape_cast %18 : vector<1x16x128xbf16> to vector<16x128xbf16>
    %20 = vector.shape_cast %11 : vector<1x16x128xbf16> to vector<16x128xbf16>
    %c0_18 = arith.constant 0 : index
    %c0_19 = arith.constant 0 : index
    %c0_20 = arith.constant 0 : index
    %21 = vector.load %arg4[%c0_18, %c0_19, %c0_20] : memref<3x128x128xbf16, #tpu.memory_space<vmem>>, vector<1x128x128xbf16>
    %22 = vector.shape_cast %21 : vector<1x128x128xbf16> to vector<128x128xbf16>
    %cst_21 = arith.constant dense<0.000000e+00> : vector<16x128xf32>
    %23 = tpu.matmul %17, %22, %cst_21 {dimension_numbers = #tpu.dot_dimension_numbers<[1], [0], [0], [1], [0, 0, 1, 1], [], []>} : vector<16x128xbf16>, vector<128x128xbf16>, vector<16x128xf32> -> vector<16x128xf32>
    %c1_22 = arith.constant 1 : index
    %c0_23 = arith.constant 0 : index
    %c0_24 = arith.constant 0 : index
    %24 = vector.load %arg4[%c1_22, %c0_23, %c0_24] : memref<3x128x128xbf16, #tpu.memory_space<vmem>>, vector<1x128x128xbf16>
    %25 = vector.shape_cast %24 : vector<1x128x128xbf16> to vector<128x128xbf16>
    %cst_25 = arith.constant dense<0.000000e+00> : vector<16x128xf32>
    %26 = tpu.matmul %20, %25, %cst_25 {dimension_numbers = #tpu.dot_dimension_numbers<[1], [0], [0], [1], [0, 0, 1, 1], [], []>} : vector<16x128xbf16>, vector<128x128xbf16>, vector<16x128xf32> -> vector<16x128xf32>
    %27 = arith.addf %23, %26 : vector<16x128xf32>
    %c2_26 = arith.constant 2 : index
    %c0_27 = arith.constant 0 : index
    %c0_28 = arith.constant 0 : index
    %28 = vector.load %arg4[%c2_26, %c0_27, %c0_28] : memref<3x128x128xbf16, #tpu.memory_space<vmem>>, vector<1x128x128xbf16>
    %29 = vector.shape_cast %28 : vector<1x128x128xbf16> to vector<128x128xbf16>
    %cst_29 = arith.constant dense<0.000000e+00> : vector<16x128xf32>
    %30 = tpu.matmul %19, %29, %cst_29 {dimension_numbers = #tpu.dot_dimension_numbers<[1], [0], [0], [1], [0, 0, 1, 1], [], []>} : vector<16x128xbf16>, vector<128x128xbf16>, vector<16x128xf32> -> vector<16x128xf32>
    %31 = arith.addf %27, %30 : vector<16x128xf32>
    %32 = vector.shape_cast %31 : vector<16x128xf32> to vector<1x16x128xf32>
    %33 = arith.truncf %32 : vector<1x16x128xf32> to vector<1x16x128xbf16>
    %c0_30 = arith.constant 0 : index
    %c0_31 = arith.constant 0 : index
    %c0_32 = arith.constant 0 : index
    %34 = vector.load %arg5[%c0_30, %c0_31, %c0_32] : memref<1x16x128xbf16, #tpu.memory_space<vmem>>, vector<1x16x128xbf16>
    tpu.vector_store %arg5[%c0_30, %c0_31, %c0_32], %33 {strides = array<i32>} : memref<1x16x128xbf16, #tpu.memory_space<vmem>>, vector<1x16x128xbf16>,
    %cst_33 = arith.constant dense<0.000000e+00> : vector<128xf32>
    %35 = vector.multi_reduction <add>, %31, %cst_33 [0] : vector<16x128xf32> to vector<128xf32>
    %36 = vector.shape_cast %35 : vector<128xf32> to vector<1x128xf32>
    %37 = arith.mulf %31, %31 : vector<16x128xf32>
    %cst_34 = arith.constant dense<0.000000e+00> : vector<128xf32>
    %38 = vector.multi_reduction <add>, %37, %cst_34 [0] : vector<16x128xf32> to vector<128xf32>
    %39 = vector.shape_cast %38 : vector<128xf32> to vector<1x128xf32>
    %40 = tpu.concatenate %36, %39 in 0 : vector<1x128xf32>, vector<1x128xf32> -> vector<2x128xf32>
    %41 = vector.shape_cast %40 : vector<2x128xf32> to vector<1x2x128xf32>
    %c0_35 = arith.constant 0 : index
    %c0_36 = arith.constant 0 : index
    %c0_37 = arith.constant 0 : index
    %42 = vector.load %arg6[%c0_35, %c0_36, %c0_37] : memref<1x2x128xf32, #tpu.memory_space<vmem>>, vector<1x2x128xf32>
    tpu.vector_store %arg6[%c0_35, %c0_36, %c0_37], %41 {strides = array<i32>} : memref<1x2x128xf32, #tpu.memory_space<vmem>>, vector<1x2x128xf32>,
    return
  }
  func.func @transform_0(%arg0: i32) -> (i32, i32, i32) {
    %c0_i32 = arith.constant 0 : i32
    %c0_i32_0 = arith.constant 0 : i32
    %c0_i32_1 = arith.constant 0 : i32
    return %arg0, %c0_i32, %c0_i32_0 : i32, i32, i32
  }
  func.func @transform_1(%arg0: i32) -> (i32, i32) {
    %c0_i32 = arith.constant 0 : i32
    %c0_i32_0 = arith.constant 0 : i32
    %c0_i32_1 = arith.constant 0 : i32
    return %c0_i32, %c0_i32_0 : i32, i32
  }
  func.func @transform_2(%arg0: i32) -> (i32, i32) {
    %c0_i32 = arith.constant 0 : i32
    %c0_i32_0 = arith.constant 0 : i32
    %c0_i32_1 = arith.constant 0 : i32
    return %c0_i32, %c0_i32_0 : i32, i32
  }
  func.func @transform_3(%arg0: i32) -> (i32, i32, i32) {
    %c0_i32 = arith.constant 0 : i32
    %c0_i32_0 = arith.constant 0 : i32
    %c0_i32_1 = arith.constant 0 : i32
    %c0_i32_2 = arith.constant 0 : i32
    return %c0_i32, %c0_i32_0, %c0_i32_1 : i32, i32, i32
  }
  func.func @transform_4(%arg0: i32) -> (i32, i32, i32) {
    %c0_i32 = arith.constant 0 : i32
    %c0_i32_0 = arith.constant 0 : i32
    %c0_i32_1 = arith.constant 0 : i32
    return %arg0, %c0_i32, %c0_i32_0 : i32, i32, i32
  }
  func.func @transform_5(%arg0: i32) -> (i32, i32, i32) {
    %c0_i32 = arith.constant 0 : i32
    %c0_i32_0 = arith.constant 0 : i32
    %c0_i32_1 = arith.constant 0 : i32
    return %arg0, %c0_i32, %c0_i32_0 : i32, i32, i32
  }
}

module attributes {stable_mosaic.version = 11 : i64} {
  func.func @_bn_tanh_kernel(%arg0: i32, %arg1: memref<1x16x128xbf16, #tpu.memory_space<vmem>>, %arg2: memref<1x128xf32, #tpu.memory_space<vmem>>, %arg3: memref<1x128xf32, #tpu.memory_space<vmem>>, %arg4: memref<1x16x128xf32, #tpu.memory_space<vmem>>) attributes {dimension_semantics = [#tpu.dimension_semantics<parallel>], iteration_bounds = array<i64: 2>, scalar_prefetch = 0 : i64, scratch_operands = 0 : i64, tpu.core_type = #tpu.core_type<tc>, window_params = [{transform_indices = @transform_0, window_bounds = array<i64: 1, 16, 128>}, {pipeline_mode = #tpu.pipeline_mode<synchronous>, transform_indices = @transform_1, window_bounds = array<i64: 1, 128>}, {pipeline_mode = #tpu.pipeline_mode<synchronous>, transform_indices = @transform_2, window_bounds = array<i64: 1, 128>}, {transform_indices = @transform_3, window_bounds = array<i64: 1, 16, 128>}]} {
    %c0 = arith.constant 0 : index
    %c0_0 = arith.constant 0 : index
    %c0_1 = arith.constant 0 : index
    %0 = vector.load %arg1[%c0, %c0_0, %c0_1] : memref<1x16x128xbf16, #tpu.memory_space<vmem>>, vector<1x16x128xbf16>
    %1 = arith.extf %0 : vector<1x16x128xbf16> to vector<1x16x128xf32>
    %c0_2 = arith.constant 0 : index
    %c0_3 = arith.constant 0 : index
    %2 = vector.load %arg2[%c0_2, %c0_3] : memref<1x128xf32, #tpu.memory_space<vmem>>, vector<1x128xf32>
    %3 = vector.shape_cast %2 : vector<1x128xf32> to vector<1x1x128xf32>
    %4 = vector.broadcast %3 : vector<1x1x128xf32> to vector<1x16x128xf32>
    %5 = arith.mulf %1, %4 : vector<1x16x128xf32>
    %c0_4 = arith.constant 0 : index
    %c0_5 = arith.constant 0 : index
    %6 = vector.load %arg3[%c0_4, %c0_5] : memref<1x128xf32, #tpu.memory_space<vmem>>, vector<1x128xf32>
    %7 = vector.shape_cast %6 : vector<1x128xf32> to vector<1x1x128xf32>
    %8 = vector.broadcast %7 : vector<1x1x128xf32> to vector<1x16x128xf32>
    %9 = arith.addf %5, %8 : vector<1x16x128xf32>
    %10 = arith.truncf %9 : vector<1x16x128xf32> to vector<1x16x128xbf16>
    %11 = math.tanh %10 : vector<1x16x128xbf16>
    %12 = arith.extf %11 : vector<1x16x128xbf16> to vector<1x16x128xf32>
    %c0_6 = arith.constant 0 : index
    %c0_7 = arith.constant 0 : index
    %c0_8 = arith.constant 0 : index
    %13 = vector.load %arg4[%c0_6, %c0_7, %c0_8] : memref<1x16x128xf32, #tpu.memory_space<vmem>>, vector<1x16x128xf32>
    tpu.vector_store %arg4[%c0_6, %c0_7, %c0_8], %12 {strides = array<i32>} : memref<1x16x128xf32, #tpu.memory_space<vmem>>, vector<1x16x128xf32>,
    return
  }
  func.func @transform_0(%arg0: i32) -> (i32, i32, i32) {
    %c0_i32 = arith.constant 0 : i32
    %c0_i32_0 = arith.constant 0 : i32
    %c0_i32_1 = arith.constant 0 : i32
    return %arg0, %c0_i32, %c0_i32_0 : i32, i32, i32
  }
  func.func @transform_1(%arg0: i32) -> (i32, i32) {
    %c0_i32 = arith.constant 0 : i32
    %c0_i32_0 = arith.constant 0 : i32
    %c0_i32_1 = arith.constant 0 : i32
    return %c0_i32, %c0_i32_0 : i32, i32
  }
  func.func @transform_2(%arg0: i32) -> (i32, i32) {
    %c0_i32 = arith.constant 0 : i32
    %c0_i32_0 = arith.constant 0 : i32
    %c0_i32_1 = arith.constant 0 : i32
    return %c0_i32, %c0_i32_0 : i32, i32
  }
  func.func @transform_3(%arg0: i32) -> (i32, i32, i32) {
    %c0_i32 = arith.constant 0 : i32
    %c0_i32_0 = arith.constant 0 : i32
    %c0_i32_1 = arith.constant 0 : i32
    return %arg0, %c0_i32, %c0_i32_0 : i32, i32, i32
  }
}

</mosaic_0001>

<llo_original>
// kernel: tile.28
$region0: #{tile.28}
  #allocation0 [shape = 's32[1]{0}', space=sflag, size = 0x4, scoped, tag = 'scoped memory for tile.28']
  %s0 = inlined_call_operand.vmem [shape: f32[8], index: 0, kind: input, shape index: {}]
  %s1 = inlined_call_operand.vmem [shape: f32[16,8], index: 1, kind: output, shape index: {}]
  // Predicated region
  $region2: #{tile.28} parent=0 // pred_check
    _
  $region3: #{tile.28} parent=0 // pred_check_branch
    %3 = sbr.rel (0) target = $region5
  $region4: #{tile.28} parent=0 // pred_region
    _
  $region5: #{tile.28} parent=0 // pred_fallthru
    _
  %v4 = vld [vmem:[%s0] ss:$0 sm:$0xff]
  %5 = vst [vmem:[%s1] sm:$0xff] %v4
  %s6 = scalar_lea.vmem %s1, 8
  %7 = vst [vmem:[%s6] sm:$0xff] %v4

// kernel: tile.29
$region0: #{tile.29}
  %s0 = inlined_call_operand.vmem [shape: f32[16,8], index: 0, kind: input, shape index: {}]
  %s1 = inlined_call_operand.vmem [shape: f32[1,128], index: 1, kind: output, shape index: {}]
  $region1: #{tile.29} parent=0
    #allocation0 [shape = 'u8[4096]{0}', space=vmem, size = 0x1000, scoped, tag = 'scoped mem for output reshape']
    %v2 = vld [vmem:[%s0] sm:$0x1]
    %vm3 = vcmask 64512
    %4 = vst.msk [vmem:[#allocation0] sm:$0x1] %vm3, %v2
    %s5 = scalar_lea.vmem %s0, 15
    %v6 = vld [vmem:[%s5] sm:$0x1]
    %7 = vrot.lane.b32.xlu0 %v6, 120
    %v8 = vpop.permute.xlu0 %7
    %vm9 = vcmask 1048512
    %10 = vst.msk [vmem:[#allocation0] sm:$0x1] %vm9, %v8
    %s11 = scalar_lea.vmem %s0, 14
    %v12 = vld [vmem:[%s11] sm:$0x1]
    %13 = vrot.lane.b32.xlu0 %v12, 112
    %v14 = vpop.permute.xlu0 %13
    %vm15 = vcmask 982912
    %16 = vst.msk [vmem:[#allocation0] sm:$0x1] %vm15, %v14
    %s17 = scalar_lea.vmem %s0, 13
    %v18 = vld [vmem:[%s17] sm:$0x1]
    %19 = vrot.lane.b32.xlu0 %v18, 104
    %v20 = vpop.permute.xlu0 %19
    %vm21 = vcmask 917312
    %22 = vst.msk [vmem:[#allocation0] sm:$0x1] %vm21, %v20
    %s23 = scalar_lea.vmem %s0, 12
    %v24 = vld [vmem:[%s23] sm:$0x1]
    %25 = vrot.lane.b32.xlu0 %v24, 96
    %v26 = vpop.permute.xlu0 %25
    %vm27 = vcmask 851712
    %28 = vst.msk [vmem:[#allocation0] sm:$0x1] %vm27, %v26
    %s29 = scalar_lea.vmem %s0, 11
    %v30 = vld [vmem:[%s29] sm:$0x1]
    %31 = vrot.lane.b32.xlu0 %v30, 88
    %v32 = vpop.permute.xlu0 %31
    %vm33 = vcmask 786112
    %34 = vst.msk [vmem:[#allocation0] sm:$0x1] %vm33, %v32
    %s35 = scalar_lea.vmem %s0, 10
    %v36 = vld [vmem:[%s35] sm:$0x1]
    %37 = vrot.lane.b32.xlu0 %v36, 80
    %v38 = vpop.permute.xlu0 %37
    %vm39 = vcmask 720512
    %40 = vst.msk [vmem:[#allocation0] sm:$0x1] %vm39, %v38
    %s41 = scalar_lea.vmem %s0, 9
    %v42 = vld [vmem:[%s41] sm:$0x1]
    %43 = vrot.lane.b32.xlu0 %v42, 72
    %v44 = vpop.permute.xlu0 %43
    %vm45 = vcmask 654912
    %46 = vst.msk [vmem:[#allocation0] sm:$0x1] %vm45, %v44
    %s47 = scalar_lea.vmem %s0, 8
    %v48 = vld [vmem:[%s47] sm:$0x1]
    %49 = vrot.lane.b32.xlu0 %v48, 64
    %v50 = vpop.permute.xlu0 %49
    %vm51 = vcmask 589312
    %52 = vst.msk [vmem:[#allocation0] sm:$0x1] %vm51, %v50
    %s53 = scalar_lea.vmem %s0, 7
    %v54 = vld [vmem:[%s53] sm:$0x1]
    %55 = vrot.lane.b32.xlu0 %v54, 56
    %v56 = vpop.permute.xlu0 %55
    %vm57 = vcmask 523712
    %58 = vst.msk [vmem:[#allocation0] sm:$0x1] %vm57, %v56
    %s59 = scalar_lea.vmem %s0, 6
    %v60 = vld [vmem:[%s59] sm:$0x1]
    %61 = vrot.lane.b32.xlu0 %v60, 48
    %v62 = vpop.permute.xlu0 %61
    %vm63 = vcmask 458112
    %64 = vst.msk [vmem:[#allocation0] sm:$0x1] %vm63, %v62
    %s65 = scalar_lea.vmem %s0, 5
    %v66 = vld [vmem:[%s65] sm:$0x1]
    %67 = vrot.lane.b32.xlu0 %v66, 40
    %v68 = vpop.permute.xlu0 %67
    %vm69 = vcmask 392512
    %70 = vst.msk [vmem:[#allocation0] sm:$0x1] %vm69, %v68
    %s71 = scalar_lea.vmem %s0, 4
    %v72 = vld [vmem:[%s71] sm:$0x1]
    %73 = vrot.lane.b32.xlu0 %v72, 32
    %v74 = vpop.permute.xlu0 %73
    %vm75 = vcmask 326912
    %76 = vst.msk [vmem:[#allocation0] sm:$0x1] %vm75, %v74
    %s77 = scalar_lea.vmem %s0, 3
    %v78 = vld [vmem:[%s77] sm:$0x1]
    %79 = vrot.lane.b32.xlu0 %v78, 24
    %v80 = vpop.permute.xlu0 %79
    %vm81 = vcmask 261312
    %82 = vst.msk [vmem:[#allocation0] sm:$0x1] %vm81, %v80
    %s83 = scalar_lea.vmem %s0, 2
    %v84 = vld [vmem:[%s83] sm:$0x1]
    %85 = vrot.lane.b32.xlu0 %v84, 16
    %v86 = vpop.permute.xlu0 %85
    %vm87 = vcmask 195712
    %88 = vst.msk [vmem:[#allocation0] sm:$0x1] %vm87, %v86
    %s89 = scalar_lea.vmem %s0, 1
    %v90 = vld [vmem:[%s89] sm:$0x1]
    %91 = vrot.lane.b32.xlu0 %v90, 8
    %v92 = vpop.permute.xlu0 %91
    %vm93 = vcmask 130112
    %94 = vst.msk [vmem:[#allocation0] sm:$0x1] %vm93, %v92
    %s96 = sshllo.u32 0, 1
    %v98 = vld [vmem:[#allocation0] sm:%s96]
    %s99 = sshllo.u32 0, 1
    %100 = vst [vmem:[%s1] sm:%s99] %v98

// kernel: conv_block_forward.3
$region0: #{conv_block_forward.3}
  #allocation0 [shape = 'u32[]', space=smem, size = 0x4, offset = 0x4, fixed_abs, tag = 'smem constant byte address 0x4 - core index']
  #allocation1 [shape = 'u32[144,128]{1,0:T(1,128)}', space=vmem, size = 0x12000, scoped, tag = 'internal scratch']
  %s0 = inlined_call_operand.vmem [shape: bf16[2,18,64], index: 0, kind: input, shape index: {}]
  %s1 = inlined_call_operand.vmem [shape: bf16[3,64,128], index: 1, kind: input, shape index: {}]
  %s2 = inlined_call_operand.vmem [shape: bf16[2,16,128], index: 2, kind: output, shape index: {0}]
  %s3 = inlined_call_operand.vmem [shape: f32[2,2,128], index: 3, kind: output, shape index: {1}]
  %4 = xla_tuple %s2, %s3
  %s5 = sld [smem:[#allocation0]]
  $region49: #{conv_block_forward.3} parent=0
    _
  %s7 = ssub.s32 1, %s5
  %s8 = scalar_select 0, %s7, %s5
  loop: start=0, step=1, limit=4
  $region2: #{conv_block_forward.3} parent=0 // loop_pre_header
    _
  $region3: #{conv_block_forward.3} parent=0 // loop_header
    %s10 = sphi 0, %s14
    %p11 = scmp.ge.s32.totalorder %s10, 4
    %s20 = sphi 0, %s22
    %s23 = sphi 0, %s20
    %s24 = sphi 0, %s23
    %s40 = sphi 0, %s24
    %s44 = sphi 0, %s44
    %s46 = sphi 0, %s44
    %s47 = sphi 0, %s46
    %s61 = sphi 0, %s47
    %s67 = sphi 0, %s69
    %s70 = sphi 0, %s67
    %s71 = sphi 0, %s70
    %s87 = sphi 0, %s71
    %s93 = sphi 0, %s95
    %s96 = sphi 0, %s93
    %s97 = sphi 0, %s96
    %s113 = sphi 0, %s97
  $region4: #{conv_block_forward.3} parent=0 // loop_header_branch
    %13 = sbr.rel (%p11) target = $region8
  $region5: #{conv_block_forward.3} parent=0 // loop_body
    %s15 = ssub.s32 %s10, 1
    %s16 = ssub.s32 %s10, 2
    %s17 = sadd.s32 %s10, 1
    %s18 = ssub.s32 %s10, %s17
    %p19 = scmp.eq.s32.totalorder %s18, 0
    %s21 = sadd.s32 %s20, 1
    %s22 = scalar_select %p19, %s20, %s21
    %p25 = pneg %p19
    %p26 = scmp.eq.s32.totalorder %s10, 1
    %p27 = por %p25, %p26
    %p28 = scmp.ne.s32.totalorder %s20, %s23
    %p29 = scmp.eq.s32.totalorder %s10, 0
    %p30 = por %p28, %p29
    %p31 = scmp.ne.s32.totalorder %s20, %s23
    %p32 = scmp.eq.s32.totalorder %s15, 1
    %p33 = por %p31, %p32
    %p34 = scmp.ne.s32.totalorder %s23, %s24
    %p35 = scmp.eq.s32.totalorder %s15, 0
    %p36 = por %p34, %p35
    %p37 = scmp.ne.s32.totalorder %s23, %s24
    %p38 = scmp.eq.s32.totalorder %s16, 1
    %p39 = por %p37, %p38
    %p41 = scmp.ne.s32.totalorder %s24, %s40
    %p42 = scmp.eq.s32.totalorder %s16, 0
    %p43 = por %p41, %p42
    %s45 = sadd.s32 %s44, 1
    %p48 = scmp.eq.s32.totalorder %s10, 1
    %p49 = scmp.ne.s32.totalorder %s44, %s46
    %p50 = scmp.eq.s32.totalorder %s10, 0
    %p51 = por %p49, %p50
    %p52 = scmp.ne.s32.totalorder %s44, %s46
    %p53 = scmp.eq.s32.totalorder %s15, 1
    %p54 = por %p52, %p53
    %p55 = scmp.ne.s32.totalorder %s46, %s47
    %p56 = scmp.eq.s32.totalorder %s15, 0
    %p57 = por %p55, %p56
    %p58 = scmp.ne.s32.totalorder %s46, %s47
    %p59 = scmp.eq.s32.totalorder %s16, 1
    %p60 = por %p58, %p59
    %p62 = scmp.ne.s32.totalorder %s47, %s61
    %p63 = scmp.eq.s32.totalorder %s16, 0
    %p64 = por %p62, %p63
    %s65 = ssub.s32 %s10, %s17
    %p66 = scmp.eq.s32.totalorder %s65, 0
    %s68 = sadd.s32 %s67, 1
    %s69 = scalar_select %p66, %s67, %s68
    %p72 = pneg %p66
    %p73 = scmp.eq.s32.totalorder %s10, 1
    %p74 = por %p72, %p73
    %p75 = scmp.ne.s32.totalorder %s67, %s70
    %p76 = scmp.eq.s32.totalorder %s10, 0
    %p77 = por %p75, %p76
    %p78 = scmp.ne.s32.totalorder %s67, %s70
    %p79 = scmp.eq.s32.totalorder %s15, 1
    %p80 = por %p78, %p79
    %p81 = scmp.ne.s32.totalorder %s70, %s71
    %p82 = scmp.eq.s32.totalorder %s15, 0
    %p83 = por %p81, %p82
    %p84 = scmp.ne.s32.totalorder %s70, %s71
    %p85 = scmp.eq.s32.totalorder %s16, 1
    %p86 = por %p84, %p85
    %p88 = scmp.ne.s32.totalorder %s71, %s87
    %p89 = scmp.eq.s32.totalorder %s16, 0
    %p90 = por %p88, %p89
    %s91 = ssub.s32 %s10, %s17
    %p92 = scmp.eq.s32.totalorder %s91, 0
    %s94 = sadd.s32 %s93, 1
    %s95 = scalar_select %p92, %s93, %s94
    %p98 = pneg %p92
    %p99 = scmp.eq.s32.totalorder %s10, 1
    %p100 = por %p98, %p99
    %p101 = scmp.ne.s32.totalorder %s93, %s96
    %p102 = scmp.eq.s32.totalorder %s10, 0
    %p103 = por %p101, %p102
    %p104 = scmp.ne.s32.totalorder %s93, %s96
    %p105 = scmp.eq.s32.totalorder %s15, 1
    %p106 = por %p104, %p105
    %p107 = scmp.ne.s32.totalorder %s96, %s97
    %p108 = scmp.eq.s32.totalorder %s15, 0
    %p109 = por %p107, %p108
    %p110 = scmp.ne.s32.totalorder %s96, %s97
    %p111 = scmp.eq.s32.totalorder %s16, 1
    %p112 = por %p110, %p111
    %p114 = scmp.ne.s32.totalorder %s97, %s113
    %p115 = scmp.eq.s32.totalorder %s16, 0
    %p116 = por %p114, %p115
    %p117 = scmp.le.s32.totalorder 1, %s10
    %p118 = scmp.lt.s32.totalorder %s10, 3
    %p119 = pnand %p117, %p118
    %p120 = pneg %p119
    // Predicated region
    $region9: #{conv_block_forward.3} parent=5 // pred_check
      _
    $region10: #{conv_block_forward.3} parent=5 // pred_check_branch
      %122 = sbr.rel (%p119) target = $region12
    $region11: #{conv_block_forward.3} parent=5 // pred_region
      %s123 = ssub.s32 %s10, 1
      // Predicated region
      $region13: #{conv_block_forward.3} parent=11 // pred_check
        %p124 = pneg %p57
      $region14: #{conv_block_forward.3} parent=11 // pred_check_branch
        %126 = sbr.rel (%p124) target = $region16
      $region15: #{conv_block_forward.3} parent=11 // pred_region
        _
      $region16: #{conv_block_forward.3} parent=11 // pred_fallthru
        _
    $region12: #{conv_block_forward.3} parent=5 // pred_fallthru
      _
    %p127 = scmp.lt.s32.totalorder %s10, 2
    // Predicated region
    $region17: #{conv_block_forward.3} parent=5 // pred_check
      %p128 = pneg %p127
    $region18: #{conv_block_forward.3} parent=5 // pred_check_branch
      %130 = sbr.rel (%p128) target = $region20
    $region19: #{conv_block_forward.3} parent=5 // pred_region
      // Predicated region
      $region21: #{conv_block_forward.3} parent=19 // pred_check
        %p131 = pneg %p30
      $region22: #{conv_block_forward.3} parent=19 // pred_check_branch
        %133 = sbr.rel (%p131) target = $region24
      $region23: #{conv_block_forward.3} parent=19 // pred_region
        %p134 = scmp.lt.s32.totalorder %s10, 1
        %s135 = scalar_select %p134, %s10, 1
        %s136 = smul.addr %s135, 3
        %s137 = smul.addr %s136, 4
        %s138 = scalar_lea.vmem %s0, %s137
      $region24: #{conv_block_forward.3} parent=19 // pred_fallthru
        _
    $region20: #{conv_block_forward.3} parent=5 // pred_fallthru
      _
    %p139 = scmp.le.s32.totalorder 1, %s10
    %p140 = scmp.lt.s32.totalorder %s10, 3
    %p141 = pnand %p139, %p140
    %p142 = pneg %p141
    // Predicated region
    $region25: #{conv_block_forward.3} parent=5 // pred_check
      _
    $region26: #{conv_block_forward.3} parent=5 // pred_check_branch
      %144 = sbr.rel (%p141) target = $region28
    $region27: #{conv_block_forward.3} parent=5 // pred_region
      %s145 = ssub.s32 %s10, 1
      %p146 = scmp.lt.s32.totalorder %s15, 1
      %s147 = scalar_select %p146, %s15, 1
      %s148 = smul.addr %s147, 3
      %s149 = smul.addr %s148, 4
      %s150 = scalar_lea.vmem %s0, %s149
      %p151 = pneg %p36
      %p152 = pneg %p33
      %p153 = pneg %p57
      %p154 = pneg %p54
      %p155 = pneg %p83
      %p156 = pneg %p80
      %p157 = scmp.lt.s32.totalorder %s15, 1
      %s158 = scalar_select %p157, %s15, 1
      %s159 = smul.addr %s158, 2
      %s160 = smul.addr %s159, 4
      %s161 = scalar_lea.vmem %s2, %s160
      %p162 = pneg %p109
      %p163 = pneg %p106
      %p164 = scmp.lt.s32.totalorder %s15, 1
      %s165 = scalar_select %p164, %s15, 1
      %s166 = smul.addr %s165, 2
      %s167 = scalar_lea.vmem %s3, %s166
      %p168 = scmp.lt.s32.totalorder %s15, 1
      %s169 = scalar_select %p168, %s15, 1
      %s170 = smul.addr %s169, 3
      %s171 = smul.addr %s170, 4
      %s172 = scalar_lea.vmem %s0, %s171
      %p173 = scmp.lt.s32.totalorder %s15, 1
      %s174 = scalar_select %p173, %s15, 1
      %s175 = smul.addr %s174, 2
      %s176 = smul.addr %s175, 4
      %s177 = scalar_lea.vmem %s2, %s176
      %p178 = scmp.lt.s32.totalorder %s15, 1
      %s179 = scalar_select %p178, %s15, 1
      %s180 = smul.addr %s179, 2
      %s181 = scalar_lea.vmem %s3, %s180
      %v183 = vld [vmem:[%s172] sm:$0xf]
      %v184 = vld [vmem:[%s172 + $0x4] sm:$0xf]
      %v185 = vld [vmem:[%s172 + $0x8] sm:$0x1]
      %v186 = vld [vmem:[%s172] sm:$0xe]
      %v187 = vld [vmem:[%s1] sm:$0xf]
      %v188 = vld [vmem:[%s1 + $0x4] sm:$0xf]
      %v189 = vld [vmem:[%s1 + $0x8] sm:$0xf]
      %v190 = vld [vmem:[%s1 + $0xc] sm:$0xf]
      %v191 = vld [vmem:[%s1 + $0x10] sm:$0xf]
      %v192 = vld [vmem:[%s1 + $0x14] sm:$0xf]
      %v193 = vld [vmem:[%s1 + $0x18] sm:$0xf]
      %v194 = vld [vmem:[%s1 + $0x1c] sm:$0xf]
      %s195 = scalar_lea.vmem %s1, 32
      %v196 = vld [vmem:[%s195] sm:$0xf]
      %v197 = vld [vmem:[%s195 + $0x4] sm:$0xf]
      %v198 = vld [vmem:[%s195 + $0x8] sm:$0xf]
      %v199 = vld [vmem:[%s195 + $0xc] sm:$0xf]
      %v200 = vld [vmem:[%s195 + $0x10] sm:$0xf]
      %v201 = vld [vmem:[%s195 + $0x14] sm:$0xf]
      %v202 = vld [vmem:[%s195 + $0x18] sm:$0xf]
      %v203 = vld [vmem:[%s195 + $0x1c] sm:$0xf]
      %v207 = vunpack.c.l.b16 %v183
      %v208 = vunpack.c.l.b16 %v184
      %v209 = vunpack.c.l.b16 %v185
      %v210 = vpack.c.b16 %v208, %v207
      %v211 = vpack.c.b16 %v209, %v209
      %vm212 = vsmask.f32 7424
      %v214 = vshrl.u32 %v210, 16
      %v216 = vshll.u32 %v210, 16
      %v218 = vrot.slane %v216, 1
      %v219 = vor.u32 %v214, %v218
      %v221 = vshll.u32 %v211, 16
      %v223 = vrot.slane %v221, 1
      %v224 = vsel %vm212, %v219, %v223
      %v233 = vunpack.c.l.b16 %v196
      %v234 = vunpack.c.l.b16 %v197
      %v235 = vunpack.c.l.b16 %v198
      %v236 = vunpack.c.l.b16 %v199
      %v237 = vunpack.c.l.b16 %v200
      %v238 = vunpack.c.l.b16 %v201
      %v239 = vunpack.c.l.b16 %v202
      %v240 = vunpack.c.l.b16 %v203
      %v241 = vpack.c.b16 %v234, %v233
      %v242 = vpack.c.b16 %v236, %v235
      %v243 = vpack.c.b16 %v238, %v237
      %v244 = vpack.c.b16 %v240, %v239
      %vm249 = vcmask 523264
      %v251 = vsel %vm249, %v224, 0
      %253 = vmatprep.subr.bf16.mxu0 0
      %254 = vmatpush1.bf16.msra.mxu0 %v241
      %255 = vmatprep.subr.bf16.mxu0 0
      %256 = vmatpush1.bf16.msra.mxu0 %v242
      %257 = vmatprep.subr.bf16.mxu0 0
      %258 = vmatpush1.bf16.msra.mxu0 %v243
      %259 = vmatprep.subr.bf16.mxu0 0
      %260 = vmatpush1.bf16.msra.mxu0 %v244
      %261 = vmatprep.subr.bf16.mxu0 0
      %262 = vmatpush1.bf16.msra.mxu0 0
      %263 = vmatprep.subr.bf16.mxu0 0
      %264 = vmatpush1.bf16.msra.mxu0 0
      %265 = vmatprep.subr.bf16.mxu0 0
      %266 = vmatpush1.bf16.msra.mxu0 0
      %267 = vmatprep.subr.bf16.mxu0 0
      %268 = vmatpush1.bf16.msra.mxu0 0
      %269 = vmatprep.subr.bf16.mxu0 0
      %270 = vmatpush1.bf16.msra.mxu0 0
      %271 = vmatprep.subr.bf16.mxu0 0
      %272 = vmatpush1.bf16.msra.mxu0 0
      %273 = vmatprep.subr.bf16.mxu0 0
      %274 = vmatpush1.bf16.msra.mxu0 0
      %275 = vmatprep.subr.bf16.mxu0 0
      %276 = vmatpush1.bf16.msra.mxu0 0
      %277 = vmatprep.subr.bf16.mxu0 0
      %278 = vmatpush1.bf16.msra.mxu0 0
      %279 = vmatprep.subr.bf16.mxu0 0
      %280 = vmatpush1.bf16.msra.mxu0 0
      %281 = vmatprep.subr.bf16.mxu0 0
      %282 = vmatpush1.bf16.msra.mxu0 0
      %283 = vmatprep.subr.bf16.mxu0 0
      %284 = vmatpush1.bf16.msra.mxu0 0
      %285 = vmatprep.mubr.bf16.mxu0 0
      %286 = vmatmul.mubr.bf16.gmra.mrb[0].mxu0 %v251
      %v287 = vpop.f32.mrb[0].mxu0
      %v288 = vadd.f32 0.0, %v287
      %v289 = vpop.f32.mrb[0].mxu0
      %v290 = vpop.f32.mrb[0].mxu0
      %v291 = vadd.f32 0.0, %v290
      %v292 = vpop.f32.mrb[0].mxu0
      %293 = vdwg.mxu0
      %v302 = vunpack.c.l.b16 %v187
      %v303 = vunpack.c.l.b16 %v188
      %v304 = vunpack.c.l.b16 %v189
      %v305 = vunpack.c.l.b16 %v190
      %v306 = vunpack.c.l.b16 %v191
      %v307 = vunpack.c.l.b16 %v192
      %v308 = vunpack.c.l.b16 %v193
      %v309 = vunpack.c.l.b16 %v194
      %v310 = vpack.c.b16 %v303, %v302
      %v311 = vpack.c.b16 %v305, %v304
      %v312 = vpack.c.b16 %v307, %v306
      %v313 = vpack.c.b16 %v309, %v308
      %v318 = vsel %vm249, %v210, 0
      %320 = vmatprep.subr.bf16.mxu0 0
      %321 = vmatpush1.bf16.msra.mxu0 %v310
      %322 = vmatprep.subr.bf16.mxu0 0
      %323 = vmatpush1.bf16.msra.mxu0 %v311
      %324 = vmatprep.subr.bf16.mxu0 0
      %325 = vmatpush1.bf16.msra.mxu0 %v312
      %326 = vmatprep.subr.bf16.mxu0 0
      %327 = vmatpush1.bf16.msra.mxu0 %v313
      %328 = vmatprep.subr.bf16.mxu0 0
      %329 = vmatpush1.bf16.msra.mxu0 0
      %330 = vmatprep.subr.bf16.mxu0 0
      %331 = vmatpush1.bf16.msra.mxu0 0
      %332 = vmatprep.subr.bf16.mxu0 0
      %333 = vmatpush1.bf16.msra.mxu0 0
      %334 = vmatprep.subr.bf16.mxu0 0
      %335 = vmatpush1.bf16.msra.mxu0 0
      %336 = vmatprep.subr.bf16.mxu0 0
      %337 = vmatpush1.bf16.msra.mxu0 0
      %338 = vmatprep.subr.bf16.mxu0 0
      %339 = vmatpush1.bf16.msra.mxu0 0
      %340 = vmatprep.subr.bf16.mxu0 0
      %341 = vmatpush1.bf16.msra.mxu0 0
      %342 = vmatprep.subr.bf16.mxu0 0
      %343 = vmatpush1.bf16.msra.mxu0 0
      %344 = vmatprep.subr.bf16.mxu0 0
      %345 = vmatpush1.bf16.msra.mxu0 0
      %346 = vmatprep.subr.bf16.mxu0 0
      %347 = vmatpush1.bf16.msra.mxu0 0
      %348 = vmatprep.subr.bf16.mxu0 0
      %349 = vmatpush1.bf16.msra.mxu0 0
      %350 = vmatprep.subr.bf16.mxu0 0
      %351 = vmatpush1.bf16.msra.mxu0 0
      %352 = vmatprep.mubr.bf16.mxu0 0
      %353 = vmatmul.mubr.bf16.gmra.mrb[0].mxu0 %v318
      %v354 = vpop.f32.mrb[0].mxu0
      %v355 = vadd.f32 %v288, %v354
      %v356 = vpop.f32.mrb[0].mxu0
      %v357 = vpop.f32.mrb[0].mxu0
      %v358 = vadd.f32 %v291, %v357
      %v359 = vpop.f32.mrb[0].mxu0
      %360 = vdwg.mxu0
      %s361 = scalar_lea.vmem %s1, 64
      %v362 = vld [vmem:[%s361] sm:$0xf]
      %v363 = vld [vmem:[%s361 + $0x4] sm:$0xf]
      %v364 = vld [vmem:[%s361 + $0x8] sm:$0xf]
      %v365 = vld [vmem:[%s361 + $0xc] sm:$0xf]
      %v366 = vld [vmem:[%s361 + $0x10] sm:$0xf]
      %v367 = vld [vmem:[%s361 + $0x14] sm:$0xf]
      %v368 = vld [vmem:[%s361 + $0x18] sm:$0xf]
      %v369 = vld [vmem:[%s361 + $0x1c] sm:$0xf]
      %v371 = vunpack.c.l.b16 %v186
      %v372 = vpack.c.b16 %v208, %v371
      %vm373 = vcmask 1046528
      %v374 = vrot.slane %v372, 1
      %v375 = vrot.slane %v211, 1
      %v376 = vsel %vm373, %v374, %v375
      %v385 = vunpack.c.l.b16 %v362
      %v386 = vunpack.c.l.b16 %v363
      %v387 = vunpack.c.l.b16 %v364
      %v388 = vunpack.c.l.b16 %v365
      %v389 = vunpack.c.l.b16 %v366
      %v390 = vunpack.c.l.b16 %v367
      %v391 = vunpack.c.l.b16 %v368
      %v392 = vunpack.c.l.b16 %v369
      %v393 = vpack.c.b16 %v386, %v385
      %v394 = vpack.c.b16 %v388, %v387
      %v395 = vpack.c.b16 %v390, %v389
      %v396 = vpack.c.b16 %v392, %v391
      %v402 = vsel %vm249, %v376, 0
      %404 = vmatprep.subr.bf16.mxu0 0
      %405 = vmatpush1.bf16.msra.mxu0 %v393
      %406 = vmatprep.subr.bf16.mxu0 0
      %407 = vmatpush1.bf16.msra.mxu0 %v394
      %408 = vmatprep.subr.bf16.mxu0 0
      %409 = vmatpush1.bf16.msra.mxu0 %v395
      %410 = vmatprep.subr.bf16.mxu0 0
      %411 = vmatpush1.bf16.msra.mxu0 %v396
      %412 = vmatprep.subr.bf16.mxu0 0
      %413 = vmatpush1.bf16.msra.mxu0 0
      %414 = vmatprep.subr.bf16.mxu0 0
      %415 = vmatpush1.bf16.msra.mxu0 0
      %416 = vmatprep.subr.bf16.mxu0 0
      %417 = vmatpush1.bf16.msra.mxu0 0
      %418 = vmatprep.subr.bf16.mxu0 0
      %419 = vmatpush1.bf16.msra.mxu0 0
      %420 = vmatprep.subr.bf16.mxu0 0
      %421 = vmatpush1.bf16.msra.mxu0 0
      %422 = vmatprep.subr.bf16.mxu0 0
      %423 = vmatpush1.bf16.msra.mxu0 0
      %424 = vmatprep.subr.bf16.mxu0 0
      %425 = vmatpush1.bf16.msra.mxu0 0
      %426 = vmatprep.subr.bf16.mxu0 0
      %427 = vmatpush1.bf16.msra.mxu0 0
      %428 = vmatprep.subr.bf16.mxu0 0
      %429 = vmatpush1.bf16.msra.mxu0 0
      %430 = vmatprep.subr.bf16.mxu0 0
      %431 = vmatpush1.bf16.msra.mxu0 0
      %432 = vmatprep.subr.bf16.mxu0 0
      %433 = vmatpush1.bf16.msra.mxu0 0
      %434 = vmatprep.subr.bf16.mxu0 0
      %435 = vmatpush1.bf16.msra.mxu0 0
      %436 = vmatprep.mubr.bf16.mxu0 0
      %437 = vmatmul.mubr.bf16.gmra.mrb[0].mxu0 %v402
      %v438 = vpop.f32.mrb[0].mxu0
      %v439 = vadd.f32 0.0, %v438
      %v440 = vpop.f32.mrb[0].mxu0
      %v441 = vpop.f32.mrb[0].mxu0
      %v442 = vadd.f32 0.0, %v441
      %v443 = vpop.f32.mrb[0].mxu0
      %444 = vdwg.mxu0
      %v445 = vadd.f32 %v355, %v439
      %v446 = vadd.f32 %v358, %v442
      %v447 = vpack.c.bf16 %v446, %v445
      %v449 = vunpack.c.l.b16 %v447
      %v450 = vunpack.c.h.b16 %v447
      %v451 = vpack.c.b16 %v449, %v449
      %v452 = vpack.c.b16 %v450, %v450
      %455 = vst [vmem:[%s177] sm:$0xf] %v451
      %456 = vst [vmem:[%s177 + $0x4] sm:$0xf] %v452
      %v457 = vadd.f32 %v445, %v446
      %v458 = vrot.slane %v457, 4
      %v459 = vadd.f32 %v457, %v458
      %v460 = vrot.slane %v459, 2
      %v461 = vadd.f32 %v459, %v460
      %v462 = vrot.slane %v461, 1
      %v463 = vadd.f32 %v461, %v462
      %v464 = vmul.f32 %v445, %v445
      %v465 = vmul.f32 %v446, %v446
      %v466 = vadd.f32 %v464, %v465
      %v467 = vrot.slane %v466, 4
      %v468 = vadd.f32 %v466, %v467
      %v469 = vrot.slane %v468, 2
      %v470 = vadd.f32 %v468, %v469
      %v471 = vrot.slane %v470, 1
      %v472 = vadd.f32 %v470, %v471
      %vm473 = vcmask 1040384
      %v474 = vsel %vm473, %v463, %v472
      %475 = vst [vmem:[%s181] sm:$0x3] %v474
      %p476 = scmp.lt.s32.totalorder %s15, 1
      %s477 = scalar_select %p476, %s15, 1
      %s478 = smul.addr %s477, 2
      %s479 = smul.addr %s478, 4
      %s480 = scalar_lea.vmem %s2, %s479
      %p481 = scmp.lt.s32.totalorder %s15, 1
      %s482 = scalar_select %p481, %s15, 1
      %s483 = smul.addr %s482, 2
      %s484 = scalar_lea.vmem %s3, %s483
      // Predicated region
      $region29: #{conv_block_forward.3} parent=27 // pred_check
        %p485 = pneg %p80
      $region30: #{conv_block_forward.3} parent=27 // pred_check_branch
        %487 = sbr.rel (%p485) target = $region32
      $region31: #{conv_block_forward.3} parent=27 // pred_region
        _
      $region32: #{conv_block_forward.3} parent=27 // pred_fallthru
        _
      // Predicated region
      $region33: #{conv_block_forward.3} parent=27 // pred_check
        %p488 = pneg %p106
      $region34: #{conv_block_forward.3} parent=27 // pred_check_branch
        %490 = sbr.rel (%p488) target = $region36
      $region35: #{conv_block_forward.3} parent=27 // pred_region
        _
      $region36: #{conv_block_forward.3} parent=27 // pred_fallthru
        _
    $region28: #{conv_block_forward.3} parent=5 // pred_fallthru
      _
    %p491 = scmp.le.s32.totalorder 2, %s10
    // Predicated region
    $region37: #{conv_block_forward.3} parent=5 // pred_check
      %p492 = pneg %p491
    $region38: #{conv_block_forward.3} parent=5 // pred_check_branch
      %494 = sbr.rel (%p492) target = $region40
    $region39: #{conv_block_forward.3} parent=5 // pred_region
      %s495 = ssub.s32 %s10, 2
      // Predicated region
      $region41: #{conv_block_forward.3} parent=39 // pred_check
        %p496 = pneg %p86
      $region42: #{conv_block_forward.3} parent=39 // pred_check_branch
        %498 = sbr.rel (%p496) target = $region44
      $region43: #{conv_block_forward.3} parent=39 // pred_region
        %p499 = scmp.lt.s32.totalorder %s16, 1
        %s500 = scalar_select %p499, %s16, 1
        %s501 = smul.addr %s500, 2
        %s502 = smul.addr %s501, 4
        %s503 = scalar_lea.vmem %s2, %s502
      $region44: #{conv_block_forward.3} parent=39 // pred_fallthru
        _
      // Predicated region
      $region45: #{conv_block_forward.3} parent=39 // pred_check
        %p504 = pneg %p112
      $region46: #{conv_block_forward.3} parent=39 // pred_check_branch
        %506 = sbr.rel (%p504) target = $region48
      $region47: #{conv_block_forward.3} parent=39 // pred_region
        %p507 = scmp.lt.s32.totalorder %s16, 1
        %s508 = scalar_select %p507, %s16, 1
        %s509 = smul.addr %s508, 2
        %s510 = scalar_lea.vmem %s3, %s509
      $region48: #{conv_block_forward.3} parent=39 // pred_fallthru
        _
    $region40: #{conv_block_forward.3} parent=5 // pred_fallthru
      _
  $region6: #{conv_block_forward.3} parent=0 // loop_footer
    %s14 = sadd.s32 1, %s10
  $region7: #{conv_block_forward.3} parent=0 // loop_footer_branch
    %9 = sbr.rel target = $region3
  $region8: #{conv_block_forward.3} parent=0 // loop_exit
    _

// kernel: conv_block_forward.5
$region0: #{conv_block_forward.5}
  #allocation0 [shape = 'u32[]', space=smem, size = 0x4, offset = 0x4, fixed_abs, tag = 'smem constant byte address 0x4 - core index']
  #allocation1 [shape = 'u32[144,128]{1,0:T(1,128)}', space=vmem, size = 0x12000, scoped, tag = 'internal scratch']
  %s0 = inlined_call_operand.vmem [shape: bf16[2,16,128], index: 0, kind: input, shape index: {}]
  %s1 = inlined_call_operand.vmem [shape: f32[1,128], index: 1, kind: input, shape index: {}]
  %s2 = inlined_call_operand.vmem [shape: f32[1,128], index: 2, kind: input, shape index: {}]
  %s3 = inlined_call_operand.vmem [shape: f32[2,16,128], index: 3, kind: output, shape index: {}]
  %s4 = sld [smem:[#allocation0]]
  $region45: #{conv_block_forward.5} parent=0
    _
  %s6 = ssub.s32 1, %s4
  %s7 = scalar_select 0, %s6, %s4
  loop: start=0, step=1, limit=4
  $region2: #{conv_block_forward.5} parent=0 // loop_pre_header
    _
  $region3: #{conv_block_forward.5} parent=0 // loop_header
    %s9 = sphi 0, %s13
    %p10 = scmp.ge.s32.totalorder %s9, 4
    %s19 = sphi 0, %s21
    %s22 = sphi 0, %s19
    %s23 = sphi 0, %s22
    %s39 = sphi 0, %s23
    %s43 = sphi 0, %s43
    %s45 = sphi 0, %s43
    %s46 = sphi 0, %s45
    %s60 = sphi 0, %s46
    %s64 = sphi 0, %s64
    %s66 = sphi 0, %s64
    %s67 = sphi 0, %s66
    %s81 = sphi 0, %s67
    %s87 = sphi 0, %s89
    %s90 = sphi 0, %s87
    %s91 = sphi 0, %s90
    %s107 = sphi 0, %s91
  $region4: #{conv_block_forward.5} parent=0 // loop_header_branch
    %12 = sbr.rel (%p10) target = $region8
  $region5: #{conv_block_forward.5} parent=0 // loop_body
    %s14 = ssub.s32 %s9, 1
    %s15 = ssub.s32 %s9, 2
    %s16 = sadd.s32 %s9, 1
    %s17 = ssub.s32 %s9, %s16
    %p18 = scmp.eq.s32.totalorder %s17, 0
    %s20 = sadd.s32 %s19, 1
    %s21 = scalar_select %p18, %s19, %s20
    %p24 = pneg %p18
    %p25 = scmp.eq.s32.totalorder %s9, 1
    %p26 = por %p24, %p25
    %p27 = scmp.ne.s32.totalorder %s19, %s22
    %p28 = scmp.eq.s32.totalorder %s9, 0
    %p29 = por %p27, %p28
    %p30 = scmp.ne.s32.totalorder %s19, %s22
    %p31 = scmp.eq.s32.totalorder %s14, 1
    %p32 = por %p30, %p31
    %p33 = scmp.ne.s32.totalorder %s22, %s23
    %p34 = scmp.eq.s32.totalorder %s14, 0
    %p35 = por %p33, %p34
    %p36 = scmp.ne.s32.totalorder %s22, %s23
    %p37 = scmp.eq.s32.totalorder %s15, 1
    %p38 = por %p36, %p37
    %p40 = scmp.ne.s32.totalorder %s23, %s39
    %p41 = scmp.eq.s32.totalorder %s15, 0
    %p42 = por %p40, %p41
    %s44 = sadd.s32 %s43, 1
    %p47 = scmp.eq.s32.totalorder %s9, 1
    %p48 = scmp.ne.s32.totalorder %s43, %s45
    %p49 = scmp.eq.s32.totalorder %s9, 0
    %p50 = por %p48, %p49
    %p51 = scmp.ne.s32.totalorder %s43, %s45
    %p52 = scmp.eq.s32.totalorder %s14, 1
    %p53 = por %p51, %p52
    %p54 = scmp.ne.s32.totalorder %s45, %s46
    %p55 = scmp.eq.s32.totalorder %s14, 0
    %p56 = por %p54, %p55
    %p57 = scmp.ne.s32.totalorder %s45, %s46
    %p58 = scmp.eq.s32.totalorder %s15, 1
    %p59 = por %p57, %p58
    %p61 = scmp.ne.s32.totalorder %s46, %s60
    %p62 = scmp.eq.s32.totalorder %s15, 0
    %p63 = por %p61, %p62
    %s65 = sadd.s32 %s64, 1
    %p68 = scmp.eq.s32.totalorder %s9, 1
    %p69 = scmp.ne.s32.totalorder %s64, %s66
    %p70 = scmp.eq.s32.totalorder %s9, 0
    %p71 = por %p69, %p70
    %p72 = scmp.ne.s32.totalorder %s64, %s66
    %p73 = scmp.eq.s32.totalorder %s14, 1
    %p74 = por %p72, %p73
    %p75 = scmp.ne.s32.totalorder %s66, %s67
    %p76 = scmp.eq.s32.totalorder %s14, 0
    %p77 = por %p75, %p76
    %p78 = scmp.ne.s32.totalorder %s66, %s67
    %p79 = scmp.eq.s32.totalorder %s15, 1
    %p80 = por %p78, %p79
    %p82 = scmp.ne.s32.totalorder %s67, %s81
    %p83 = scmp.eq.s32.totalorder %s15, 0
    %p84 = por %p82, %p83
    %s85 = ssub.s32 %s9, %s16
    %p86 = scmp.eq.s32.totalorder %s85, 0
    %s88 = sadd.s32 %s87, 1
    %s89 = scalar_select %p86, %s87, %s88
    %p92 = pneg %p86
    %p93 = scmp.eq.s32.totalorder %s9, 1
    %p94 = por %p92, %p93
    %p95 = scmp.ne.s32.totalorder %s87, %s90
    %p96 = scmp.eq.s32.totalorder %s9, 0
    %p97 = por %p95, %p96
    %p98 = scmp.ne.s32.totalorder %s87, %s90
    %p99 = scmp.eq.s32.totalorder %s14, 1
    %p100 = por %p98, %p99
    %p101 = scmp.ne.s32.totalorder %s90, %s91
    %p102 = scmp.eq.s32.totalorder %s14, 0
    %p103 = por %p101, %p102
    %p104 = scmp.ne.s32.totalorder %s90, %s91
    %p105 = scmp.eq.s32.totalorder %s15, 1
    %p106 = por %p104, %p105
    %p108 = scmp.ne.s32.totalorder %s91, %s107
    %p109 = scmp.eq.s32.totalorder %s15, 0
    %p110 = por %p108, %p109
    %p111 = scmp.le.s32.totalorder 1, %s9
    %p112 = scmp.lt.s32.totalorder %s9, 3
    %p113 = pnand %p111, %p112
    %p114 = pneg %p113
    // Predicated region
    $region9: #{conv_block_forward.5} parent=5 // pred_check
      _
    $region10: #{conv_block_forward.5} parent=5 // pred_check_branch
      %116 = sbr.rel (%p113) target = $region12
    $region11: #{conv_block_forward.5} parent=5 // pred_region
      %s117 = ssub.s32 %s9, 1
      // Predicated region
      $region13: #{conv_block_forward.5} parent=11 // pred_check
        %p118 = pneg %p56
      $region14: #{conv_block_forward.5} parent=11 // pred_check_branch
        %120 = sbr.rel (%p118) target = $region16
      $region15: #{conv_block_forward.5} parent=11 // pred_region
        _
      $region16: #{conv_block_forward.5} parent=11 // pred_fallthru
        _
      // Predicated region
      $region17: #{conv_block_forward.5} parent=11 // pred_check
        %p121 = pneg %p77
      $region18: #{conv_block_forward.5} parent=11 // pred_check_branch
        %123 = sbr.rel (%p121) target = $region20
      $region19: #{conv_block_forward.5} parent=11 // pred_region
        _
      $region20: #{conv_block_forward.5} parent=11 // pred_fallthru
        _
    $region12: #{conv_block_forward.5} parent=5 // pred_fallthru
      _
    %p124 = scmp.lt.s32.totalorder %s9, 2
    // Predicated region
    $region21: #{conv_block_forward.5} parent=5 // pred_check
      %p125 = pneg %p124
    $region22: #{conv_block_forward.5} parent=5 // pred_check_branch
      %127 = sbr.rel (%p125) target = $region24
    $region23: #{conv_block_forward.5} parent=5 // pred_region
      // Predicated region
      $region25: #{conv_block_forward.5} parent=23 // pred_check
        %p128 = pneg %p29
      $region26: #{conv_block_forward.5} parent=23 // pred_check_branch
        %130 = sbr.rel (%p128) target = $region28
      $region27: #{conv_block_forward.5} parent=23 // pred_region
        %p131 = scmp.lt.s32.totalorder %s9, 1
        %s132 = scalar_select %p131, %s9, 1
        %s133 = smul.addr %s132, 2
        %s134 = smul.addr %s133, 4
        %s135 = scalar_lea.vmem %s0, %s134
      $region28: #{conv_block_forward.5} parent=23 // pred_fallthru
        _
    $region24: #{conv_block_forward.5} parent=5 // pred_fallthru
      _
    %p136 = scmp.le.s32.totalorder 1, %s9
    %p137 = scmp.lt.s32.totalorder %s9, 3
    %p138 = pnand %p136, %p137
    %p139 = pneg %p138
    // Predicated region
    $region29: #{conv_block_forward.5} parent=5 // pred_check
      _
    $region30: #{conv_block_forward.5} parent=5 // pred_check_branch
      %141 = sbr.rel (%p138) target = $region32
    $region31: #{conv_block_forward.5} parent=5 // pred_region
      %s142 = ssub.s32 %s9, 1
      %p143 = scmp.lt.s32.totalorder %s14, 1
      %s144 = scalar_select %p143, %s14, 1
      %s145 = smul.addr %s144, 2
      %s146 = smul.addr %s145, 4
      %s147 = scalar_lea.vmem %s0, %s146
      %p148 = pneg %p35
      %p149 = pneg %p32
      %p150 = pneg %p56
      %p151 = pneg %p53
      %p152 = pneg %p77
      %p153 = pneg %p74
      %p154 = pneg %p103
      %p155 = pneg %p100
      %p156 = scmp.lt.s32.totalorder %s14, 1
      %s157 = scalar_select %p156, %s14, 1
      %s158 = smul.addr %s157, 2
      %s159 = smul.addr %s158, 8
      %s160 = scalar_lea.vmem %s3, %s159
      %p161 = scmp.lt.s32.totalorder %s14, 1
      %s162 = scalar_select %p161, %s14, 1
      %s163 = smul.addr %s162, 2
      %s164 = smul.addr %s163, 4
      %s165 = scalar_lea.vmem %s0, %s164
      %p166 = scmp.lt.s32.totalorder %s14, 1
      %s167 = scalar_select %p166, %s14, 1
      %s168 = smul.addr %s167, 2
      %s169 = smul.addr %s168, 8
      %s170 = scalar_lea.vmem %s3, %s169
      %v171 = vld [vmem:[%s165] sm:$0xf]
      %v172 = vld [vmem:[%s165 + $0x4] sm:$0xf]
      %v173 = vunpack.c.l.bf16 %v171
      %v174 = vunpack.c.l.bf16 %v172
      %v175 = vld [vmem:[%s1] sm:$0x1]
      %v177 = vlaneseq
      %v178 = vshrl.u32 %v177, 7
      %v179 = vsub.s32 0, %v178
      %v180 = vrot.slane %v175, %v179
      %v182 = vmul.f32 %v173, %v180
      %v183 = vmul.f32 %v174, %v180
      %v184 = vld [vmem:[%s2] sm:$0x1]
      %v186 = vlaneseq
      %v187 = vshrl.u32 %v186, 7
      %v188 = vsub.s32 0, %v187
      %v189 = vrot.slane %v184, %v188
      %v191 = vadd.f32 %v182, %v189
      %v192 = vadd.f32 %v183, %v189
      %v193 = vpack.c.bf16 %v192, %v191
      %v194 = vtanh.bf16.pop %v193
      %v195 = vunpack.c.l.bf16 %v194
      %v196 = vunpack.c.h.bf16 %v194
      %197 = vst [vmem:[%s170] sm:$0xff] %v195
      %198 = vst [vmem:[%s170 + $0x8] sm:$0xff] %v196
      %p199 = scmp.lt.s32.totalorder %s14, 1
      %s200 = scalar_select %p199, %s14, 1
      %s201 = smul.addr %s200, 2
      %s202 = smul.addr %s201, 8
      %s203 = scalar_lea.vmem %s3, %s202
      // Predicated region
      $region33: #{conv_block_forward.5} parent=31 // pred_check
        %p204 = pneg %p100
      $region34: #{conv_block_forward.5} parent=31 // pred_check_branch
        %206 = sbr.rel (%p204) target = $region36
      $region35: #{conv_block_forward.5} parent=31 // pred_region
        _
      $region36: #{conv_block_forward.5} parent=31 // pred_fallthru
        _
    $region32: #{conv_block_forward.5} parent=5 // pred_fallthru
      _
    %p207 = scmp.le.s32.totalorder 2, %s9
    // Predicated region
    $region37: #{conv_block_forward.5} parent=5 // pred_check
      %p208 = pneg %p207
    $region38: #{conv_block_forward.5} parent=5 // pred_check_branch
      %210 = sbr.rel (%p208) target = $region40
    $region39: #{conv_block_forward.5} parent=5 // pred_region
      %s211 = ssub.s32 %s9, 2
      // Predicated region
      $region41: #{conv_block_forward.5} parent=39 // pred_check
        %p212 = pneg %p106
      $region42: #{conv_block_forward.5} parent=39 // pred_check_branch
        %214 = sbr.rel (%p212) target = $region44
      $region43: #{conv_block_forward.5} parent=39 // pred_region
        %p215 = scmp.lt.s32.totalorder %s15, 1
        %s216 = scalar_select %p215, %s15, 1
        %s217 = smul.addr %s216, 2
        %s218 = smul.addr %s217, 8
        %s219 = scalar_lea.vmem %s3, %s218
      $region44: #{conv_block_forward.5} parent=39 // pred_fallthru
        _
    $region40: #{conv_block_forward.5} parent=5 // pred_fallthru
      _
  $region6: #{conv_block_forward.5} parent=0 // loop_footer
    %s13 = sadd.s32 1, %s9
  $region7: #{conv_block_forward.5} parent=0 // loop_footer_branch
    %8 = sbr.rel target = $region3
  $region8: #{conv_block_forward.5} parent=0 // loop_exit
    _

// kernel: conv_block_forward.4
$region0: #{conv_block_forward.4}
  #allocation0 [shape = 'u32[]', space=smem, size = 0x4, offset = 0x4, fixed_abs, tag = 'smem constant byte address 0x4 - core index']
  #allocation1 [shape = 'u32[144,128]{1,0:T(1,128)}', space=vmem, size = 0x12000, scoped, tag = 'internal scratch']
  #allocation2 [shape = 'bf16[1,18,128]{2,1,0:T(8,128)(2,1)}', space=vmem, size = 0x1800, scoped, tag = 'scratch operand']
  %s0 = inlined_call_operand.vmem [shape: bf16[2,16,128], index: 0, kind: input, shape index: {}]
  %s1 = inlined_call_operand.vmem [shape: f32[1,128], index: 1, kind: input, shape index: {}]
  %s2 = inlined_call_operand.vmem [shape: f32[1,128], index: 2, kind: input, shape index: {}]
  %s3 = inlined_call_operand.vmem [shape: bf16[3,128,128], index: 3, kind: input, shape index: {}]
  %s4 = inlined_call_operand.vmem [shape: bf16[2,16,128], index: 4, kind: output, shape index: {0}]
  %s5 = inlined_call_operand.vmem [shape: f32[2,2,128], index: 5, kind: output, shape index: {1}]
  %6 = xla_tuple %s4, %s5
  %s7 = sld [smem:[#allocation0]]
  $region57: #{conv_block_forward.4} parent=0
    _
  %s9 = ssub.s32 1, %s7
  %s10 = scalar_select 0, %s9, %s7
  loop: start=0, step=1, limit=4
  $region2: #{conv_block_forward.4} parent=0 // loop_pre_header
    _
  $region3: #{conv_block_forward.4} parent=0 // loop_header
    %s12 = sphi 0, %s16
    %p13 = scmp.ge.s32.totalorder %s12, 4
    %s22 = sphi 0, %s24
    %s25 = sphi 0, %s22
    %s26 = sphi 0, %s25
    %s42 = sphi 0, %s26
    %s46 = sphi 0, %s46
    %s48 = sphi 0, %s46
    %s49 = sphi 0, %s48
    %s63 = sphi 0, %s49
    %s67 = sphi 0, %s67
    %s69 = sphi 0, %s67
    %s70 = sphi 0, %s69
    %s84 = sphi 0, %s70
    %s88 = sphi 0, %s88
    %s90 = sphi 0, %s88
    %s91 = sphi 0, %s90
    %s105 = sphi 0, %s91
    %s111 = sphi 0, %s113
    %s114 = sphi 0, %s111
    %s115 = sphi 0, %s114
    %s131 = sphi 0, %s115
    %s137 = sphi 0, %s139
    %s140 = sphi 0, %s137
    %s141 = sphi 0, %s140
    %s157 = sphi 0, %s141
  $region4: #{conv_block_forward.4} parent=0 // loop_header_branch
    %15 = sbr.rel (%p13) target = $region8
  $region5: #{conv_block_forward.4} parent=0 // loop_body
    %s17 = ssub.s32 %s12, 1
    %s18 = ssub.s32 %s12, 2
    %s19 = sadd.s32 %s12, 1
    %s20 = ssub.s32 %s12, %s19
    %p21 = scmp.eq.s32.totalorder %s20, 0
    %s23 = sadd.s32 %s22, 1
    %s24 = scalar_select %p21, %s22, %s23
    %p27 = pneg %p21
    %p28 = scmp.eq.s32.totalorder %s12, 1
    %p29 = por %p27, %p28
    %p30 = scmp.ne.s32.totalorder %s22, %s25
    %p31 = scmp.eq.s32.totalorder %s12, 0
    %p32 = por %p30, %p31
    %p33 = scmp.ne.s32.totalorder %s22, %s25
    %p34 = scmp.eq.s32.totalorder %s17, 1
    %p35 = por %p33, %p34
    %p36 = scmp.ne.s32.totalorder %s25, %s26
    %p37 = scmp.eq.s32.totalorder %s17, 0
    %p38 = por %p36, %p37
    %p39 = scmp.ne.s32.totalorder %s25, %s26
    %p40 = scmp.eq.s32.totalorder %s18, 1
    %p41 = por %p39, %p40
    %p43 = scmp.ne.s32.totalorder %s26, %s42
    %p44 = scmp.eq.s32.totalorder %s18, 0
    %p45 = por %p43, %p44
    %s47 = sadd.s32 %s46, 1
    %p50 = scmp.eq.s32.totalorder %s12, 1
    %p51 = scmp.ne.s32.totalorder %s46, %s48
    %p52 = scmp.eq.s32.totalorder %s12, 0
    %p53 = por %p51, %p52
    %p54 = scmp.ne.s32.totalorder %s46, %s48
    %p55 = scmp.eq.s32.totalorder %s17, 1
    %p56 = por %p54, %p55
    %p57 = scmp.ne.s32.totalorder %s48, %s49
    %p58 = scmp.eq.s32.totalorder %s17, 0
    %p59 = por %p57, %p58
    %p60 = scmp.ne.s32.totalorder %s48, %s49
    %p61 = scmp.eq.s32.totalorder %s18, 1
    %p62 = por %p60, %p61
    %p64 = scmp.ne.s32.totalorder %s49, %s63
    %p65 = scmp.eq.s32.totalorder %s18, 0
    %p66 = por %p64, %p65
    %s68 = sadd.s32 %s67, 1
    %p71 = scmp.eq.s32.totalorder %s12, 1
    %p72 = scmp.ne.s32.totalorder %s67, %s69
    %p73 = scmp.eq.s32.totalorder %s12, 0
    %p74 = por %p72, %p73
    %p75 = scmp.ne.s32.totalorder %s67, %s69
    %p76 = scmp.eq.s32.totalorder %s17, 1
    %p77 = por %p75, %p76
    %p78 = scmp.ne.s32.totalorder %s69, %s70
    %p79 = scmp.eq.s32.totalorder %s17, 0
    %p80 = por %p78, %p79
    %p81 = scmp.ne.s32.totalorder %s69, %s70
    %p82 = scmp.eq.s32.totalorder %s18, 1
    %p83 = por %p81, %p82
    %p85 = scmp.ne.s32.totalorder %s70, %s84
    %p86 = scmp.eq.s32.totalorder %s18, 0
    %p87 = por %p85, %p86
    %s89 = sadd.s32 %s88, 1
    %p92 = scmp.eq.s32.totalorder %s12, 1
    %p93 = scmp.ne.s32.totalorder %s88, %s90
    %p94 = scmp.eq.s32.totalorder %s12, 0
    %p95 = por %p93, %p94
    %p96 = scmp.ne.s32.totalorder %s88, %s90
    %p97 = scmp.eq.s32.totalorder %s17, 1
    %p98 = por %p96, %p97
    %p99 = scmp.ne.s32.totalorder %s90, %s91
    %p100 = scmp.eq.s32.totalorder %s17, 0
    %p101 = por %p99, %p100
    %p102 = scmp.ne.s32.totalorder %s90, %s91
    %p103 = scmp.eq.s32.totalorder %s18, 1
    %p104 = por %p102, %p103
    %p106 = scmp.ne.s32.totalorder %s91, %s105
    %p107 = scmp.eq.s32.totalorder %s18, 0
    %p108 = por %p106, %p107
    %s109 = ssub.s32 %s12, %s19
    %p110 = scmp.eq.s32.totalorder %s109, 0
    %s112 = sadd.s32 %s111, 1
    %s113 = scalar_select %p110, %s111, %s112
    %p116 = pneg %p110
    %p117 = scmp.eq.s32.totalorder %s12, 1
    %p118 = por %p116, %p117
    %p119 = scmp.ne.s32.totalorder %s111, %s114
    %p120 = scmp.eq.s32.totalorder %s12, 0
    %p121 = por %p119, %p120
    %p122 = scmp.ne.s32.totalorder %s111, %s114
    %p123 = scmp.eq.s32.totalorder %s17, 1
    %p124 = por %p122, %p123
    %p125 = scmp.ne.s32.totalorder %s114, %s115
    %p126 = scmp.eq.s32.totalorder %s17, 0
    %p127 = por %p125, %p126
    %p128 = scmp.ne.s32.totalorder %s114, %s115
    %p129 = scmp.eq.s32.totalorder %s18, 1
    %p130 = por %p128, %p129
    %p132 = scmp.ne.s32.totalorder %s115, %s131
    %p133 = scmp.eq.s32.totalorder %s18, 0
    %p134 = por %p132, %p133
    %s135 = ssub.s32 %s12, %s19
    %p136 = scmp.eq.s32.totalorder %s135, 0
    %s138 = sadd.s32 %s137, 1
    %s139 = scalar_select %p136, %s137, %s138
    %p142 = pneg %p136
    %p143 = scmp.eq.s32.totalorder %s12, 1
    %p144 = por %p142, %p143
    %p145 = scmp.ne.s32.totalorder %s137, %s140
    %p146 = scmp.eq.s32.totalorder %s12, 0
    %p147 = por %p145, %p146
    %p148 = scmp.ne.s32.totalorder %s137, %s140
    %p149 = scmp.eq.s32.totalorder %s17, 1
    %p150 = por %p148, %p149
    %p151 = scmp.ne.s32.totalorder %s140, %s141
    %p152 = scmp.eq.s32.totalorder %s17, 0
    %p153 = por %p151, %p152
    %p154 = scmp.ne.s32.totalorder %s140, %s141
    %p155 = scmp.eq.s32.totalorder %s18, 1
    %p156 = por %p154, %p155
    %p158 = scmp.ne.s32.totalorder %s141, %s157
    %p159 = scmp.eq.s32.totalorder %s18, 0
    %p160 = por %p158, %p159
    %p161 = scmp.le.s32.totalorder 1, %s12
    %p162 = scmp.lt.s32.totalorder %s12, 3
    %p163 = pnand %p161, %p162
    %p164 = pneg %p163
    // Predicated region
    $region9: #{conv_block_forward.4} parent=5 // pred_check
      _
    $region10: #{conv_block_forward.4} parent=5 // pred_check_branch
      %166 = sbr.rel (%p163) target = $region12
    $region11: #{conv_block_forward.4} parent=5 // pred_region
      %s167 = ssub.s32 %s12, 1
      // Predicated region
      $region13: #{conv_block_forward.4} parent=11 // pred_check
        %p168 = pneg %p59
      $region14: #{conv_block_forward.4} parent=11 // pred_check_branch
        %170 = sbr.rel (%p168) target = $region16
      $region15: #{conv_block_forward.4} parent=11 // pred_region
        _
      $region16: #{conv_block_forward.4} parent=11 // pred_fallthru
        _
      // Predicated region
      $region17: #{conv_block_forward.4} parent=11 // pred_check
        %p171 = pneg %p80
      $region18: #{conv_block_forward.4} parent=11 // pred_check_branch
        %173 = sbr.rel (%p171) target = $region20
      $region19: #{conv_block_forward.4} parent=11 // pred_region
        _
      $region20: #{conv_block_forward.4} parent=11 // pred_fallthru
        _
      // Predicated region
      $region21: #{conv_block_forward.4} parent=11 // pred_check
        %p174 = pneg %p101
      $region22: #{conv_block_forward.4} parent=11 // pred_check_branch
        %176 = sbr.rel (%p174) target = $region24
      $region23: #{conv_block_forward.4} parent=11 // pred_region
        _
      $region24: #{conv_block_forward.4} parent=11 // pred_fallthru
        _
    $region12: #{conv_block_forward.4} parent=5 // pred_fallthru
      _
    %p177 = scmp.lt.s32.totalorder %s12, 2
    // Predicated region
    $region25: #{conv_block_forward.4} parent=5 // pred_check
      %p178 = pneg %p177
    $region26: #{conv_block_forward.4} parent=5 // pred_check_branch
      %180 = sbr.rel (%p178) target = $region28
    $region27: #{conv_block_forward.4} parent=5 // pred_region
      // Predicated region
      $region29: #{conv_block_forward.4} parent=27 // pred_check
        %p181 = pneg %p32
      $region30: #{conv_block_forward.4} parent=27 // pred_check_branch
        %183 = sbr.rel (%p181) target = $region32
      $region31: #{conv_block_forward.4} parent=27 // pred_region
        %p184 = scmp.lt.s32.totalorder %s12, 1
        %s185 = scalar_select %p184, %s12, 1
        %s186 = smul.addr %s185, 2
        %s187 = smul.addr %s186, 4
        %s188 = scalar_lea.vmem %s0, %s187
      $region32: #{conv_block_forward.4} parent=27 // pred_fallthru
        _
    $region28: #{conv_block_forward.4} parent=5 // pred_fallthru
      _
    %p189 = scmp.le.s32.totalorder 1, %s12
    %p190 = scmp.lt.s32.totalorder %s12, 3
    %p191 = pnand %p189, %p190
    %p192 = pneg %p191
    // Predicated region
    $region33: #{conv_block_forward.4} parent=5 // pred_check
      _
    $region34: #{conv_block_forward.4} parent=5 // pred_check_branch
      %194 = sbr.rel (%p191) target = $region36
    $region35: #{conv_block_forward.4} parent=5 // pred_region
      %s195 = ssub.s32 %s12, 1
      %p196 = scmp.lt.s32.totalorder %s17, 1
      %s197 = scalar_select %p196, %s17, 1
      %s198 = smul.addr %s197, 2
      %s199 = smul.addr %s198, 4
      %s200 = scalar_lea.vmem %s0, %s199
      %p201 = pneg %p38
      %p202 = pneg %p35
      %p203 = pneg %p59
      %p204 = pneg %p56
      %p205 = pneg %p80
      %p206 = pneg %p77
      %p207 = pneg %p101
      %p208 = pneg %p98
      %p209 = pneg %p127
      %p210 = pneg %p124
      %p211 = scmp.lt.s32.totalorder %s17, 1
      %s212 = scalar_select %p211, %s17, 1
      %s213 = smul.addr %s212, 2
      %s214 = smul.addr %s213, 4
      %s215 = scalar_lea.vmem %s4, %s214
      %p216 = pneg %p153
      %p217 = pneg %p150
      %p218 = scmp.lt.s32.totalorder %s17, 1
      %s219 = scalar_select %p218, %s17, 1
      %s220 = smul.addr %s219, 2
      %s221 = scalar_lea.vmem %s5, %s220
      %p222 = scmp.lt.s32.totalorder %s17, 1
      %s223 = scalar_select %p222, %s17, 1
      %s224 = smul.addr %s223, 2
      %s225 = smul.addr %s224, 4
      %s226 = scalar_lea.vmem %s0, %s225
      %p227 = scmp.lt.s32.totalorder %s17, 1
      %s228 = scalar_select %p227, %s17, 1
      %s229 = smul.addr %s228, 2
      %s230 = smul.addr %s229, 4
      %s231 = scalar_lea.vmem %s4, %s230
      %p232 = scmp.lt.s32.totalorder %s17, 1
      %s233 = scalar_select %p232, %s17, 1
      %s234 = smul.addr %s233, 2
      %s235 = scalar_lea.vmem %s5, %s234
      %v237 = vld [vmem:[%s226] sm:$0xf]
      %v238 = vld [vmem:[%s226 + $0x4] sm:$0xf]
      %v239 = vunpack.c.l.bf16 %v237
      %v240 = vunpack.c.l.bf16 %v238
      %v241 = vld [vmem:[%s1] sm:$0x1]
      %v243 = vlaneseq
      %v244 = vshrl.u32 %v243, 7
      %v245 = vsub.s32 0, %v244
      %v246 = vrot.slane %v241, %v245
      %v248 = vmul.f32 %v239, %v246
      %v249 = vmul.f32 %v240, %v246
      %v250 = vld [vmem:[%s2] sm:$0x1]
      %v252 = vlaneseq
      %v253 = vshrl.u32 %v252, 7
      %v254 = vsub.s32 0, %v253
      %v255 = vrot.slane %v250, %v254
      %v257 = vadd.f32 %v248, %v255
      %v258 = vadd.f32 %v249, %v255
      %v259 = vpack.c.bf16 %v258, %v257
      %v260 = vtanh.bf16.pop %v259
      %vm261 = vcmask 1040384
      %vm262 = vsmask.f32 256
      %vm263 = vmand %vm261, %vm262
      %v264 = vld [vmem:[#allocation2] sm:$0x1]
      %v265 = vsel %vm263, 0, %v264
      %266 = vst [vmem:[#allocation2] sm:$0x1] %v265
      %vm267 = vsmask.f32 7938
      %vm268 = vmand %vm261, %vm267
      %v269 = vld [vmem:[#allocation2 + $0x8] sm:$0x1]
      %v270 = vsel %vm268, 0, %v269
      %271 = vst [vmem:[#allocation2 + $0x8] sm:$0x1] %v270
      %v273 = vunpack.c.l.b16 %v260
      %v274 = vunpack.c.h.b16 %v260
      %v275 = vpack.c.b16 %v273, %v273
      %v276 = vpack.c.b16 %v274, %v274
      %vm277 = vsmask.f32 4368
      %vm278 = vmor %vm262, %vm277
      %v280 = vshrl.u32 %v275, 16
      %v282 = vrot.slane %v280, 7
      %v283 = vshll.u32 %v275, 16
      %v285 = vor.u32 %v282, %v283
      %v286 = vrot.slane %v282, 4
      %v288 = vshrl.u32 %v276, 16
      %v290 = vrot.slane %v288, 7
      %v291 = vshll.u32 %v276, 16
      %v293 = vor.u32 %v290, %v291
      %v294 = vsel %vm278, %v286, %v293
      %v295 = vrot.slane %v290, 4
      %vm299 = vcmask 1043456
      %vm300 = vmand %vm299, %vm267
      %v301 = vld [vmem:[#allocation2] sm:$0xf]
      %v302 = vsel %vm300, %v285, %v301
      %303 = vst [vmem:[#allocation2] sm:$0xf] %v302
      %304 = vst [vmem:[#allocation2 + $0x4] sm:$0xf] %v294
      %v305 = vld [vmem:[#allocation2 + $0x8] sm:$0x1]
      %v306 = vsel %vm263, %v295, %v305
      %307 = vst [vmem:[#allocation2 + $0x8] sm:$0x1] %v306
      %v308 = vld [vmem:[#allocation2] sm:$0xf]
      %v309 = vld [vmem:[#allocation2 + $0x4] sm:$0xf]
      %v310 = vld [vmem:[#allocation2] sm:$0xe]
      %v311 = vld [vmem:[#allocation2 + $0x8] sm:$0x1]
      %v312 = vld [vmem:[%s3] sm:$0xf]
      %v313 = vld [vmem:[%s3 + $0x4] sm:$0xf]
      %v314 = vld [vmem:[%s3 + $0x8] sm:$0xf]
      %v315 = vld [vmem:[%s3 + $0xc] sm:$0xf]
      %v316 = vld [vmem:[%s3 + $0x10] sm:$0xf]
      %v317 = vld [vmem:[%s3 + $0x14] sm:$0xf]
      %v318 = vld [vmem:[%s3 + $0x18] sm:$0xf]
      %v319 = vld [vmem:[%s3 + $0x1c] sm:$0xf]
      %v320 = vld [vmem:[%s3 + $0x20] sm:$0xf]
      %v321 = vld [vmem:[%s3 + $0x24] sm:$0xf]
      %v322 = vld [vmem:[%s3 + $0x28] sm:$0xf]
      %v323 = vld [vmem:[%s3 + $0x2c] sm:$0xf]
      %v324 = vld [vmem:[%s3 + $0x30] sm:$0xf]
      %v325 = vld [vmem:[%s3 + $0x34] sm:$0xf]
      %v326 = vld [vmem:[%s3 + $0x38] sm:$0xf]
      %v327 = vld [vmem:[%s3 + $0x3c] sm:$0xf]
      %s328 = scalar_lea.vmem %s3, 64
      %v329 = vld [vmem:[%s328] sm:$0xf]
      %v330 = vld [vmem:[%s328 + $0x4] sm:$0xf]
      %v331 = vld [vmem:[%s328 + $0x8] sm:$0xf]
      %v332 = vld [vmem:[%s328 + $0xc] sm:$0xf]
      %v333 = vld [vmem:[%s328 + $0x10] sm:$0xf]
      %v334 = vld [vmem:[%s328 + $0x14] sm:$0xf]
      %v335 = vld [vmem:[%s328 + $0x18] sm:$0xf]
      %v336 = vld [vmem:[%s328 + $0x1c] sm:$0xf]
      %v337 = vld [vmem:[%s328 + $0x20] sm:$0xf]
      %v338 = vld [vmem:[%s328 + $0x24] sm:$0xf]
      %v339 = vld [vmem:[%s328 + $0x28] sm:$0xf]
      %v340 = vld [vmem:[%s328 + $0x2c] sm:$0xf]
      %v341 = vld [vmem:[%s328 + $0x30] sm:$0xf]
      %v342 = vld [vmem:[%s328 + $0x34] sm:$0xf]
      %v343 = vld [vmem:[%s328 + $0x38] sm:$0xf]
      %v344 = vld [vmem:[%s328 + $0x3c] sm:$0xf]
      %v361 = vunpack.c.l.b16 %v329
      %v362 = vunpack.c.l.b16 %v330
      %v363 = vunpack.c.l.b16 %v331
      %v364 = vunpack.c.l.b16 %v332
      %v365 = vunpack.c.l.b16 %v333
      %v366 = vunpack.c.l.b16 %v334
      %v367 = vunpack.c.l.b16 %v335
      %v368 = vunpack.c.l.b16 %v336
      %v369 = vunpack.c.l.b16 %v337
      %v370 = vunpack.c.l.b16 %v338
      %v371 = vunpack.c.l.b16 %v339
      %v372 = vunpack.c.l.b16 %v340
      %v373 = vunpack.c.l.b16 %v341
      %v374 = vunpack.c.l.b16 %v342
      %v375 = vunpack.c.l.b16 %v343
      %v376 = vunpack.c.l.b16 %v344
      %v377 = vpack.c.b16 %v362, %v361
      %v378 = vpack.c.b16 %v364, %v363
      %v379 = vpack.c.b16 %v366, %v365
      %v380 = vpack.c.b16 %v368, %v367
      %v381 = vpack.c.b16 %v370, %v369
      %v382 = vpack.c.b16 %v372, %v371
      %v383 = vpack.c.b16 %v374, %v373
      %v384 = vpack.c.b16 %v376, %v375
      %393 = vmatprep.subr.bf16.mxu0 0
      %394 = vmatpush1.bf16.msra.mxu0 %v377
      %395 = vmatprep.subr.bf16.mxu0 0
      %396 = vmatpush1.bf16.msra.mxu0 %v378
      %397 = vmatprep.subr.bf16.mxu0 0
      %398 = vmatpush1.bf16.msra.mxu0 %v379
      %399 = vmatprep.subr.bf16.mxu0 0
      %400 = vmatpush1.bf16.msra.mxu0 %v380
      %401 = vmatprep.subr.bf16.mxu0 0
      %402 = vmatpush1.bf16.msra.mxu0 %v381
      %403 = vmatprep.subr.bf16.mxu0 0
      %404 = vmatpush1.bf16.msra.mxu0 %v382
      %405 = vmatprep.subr.bf16.mxu0 0
      %406 = vmatpush1.bf16.msra.mxu0 %v383
      %407 = vmatprep.subr.bf16.mxu0 0
      %408 = vmatpush1.bf16.msra.mxu0 %v384
      %409 = vmatprep.subr.bf16.mxu0 0
      %410 = vmatpush1.bf16.msra.mxu0 0
      %411 = vmatprep.subr.bf16.mxu0 0
      %412 = vmatpush1.bf16.msra.mxu0 0
      %413 = vmatprep.subr.bf16.mxu0 0
      %414 = vmatpush1.bf16.msra.mxu0 0
      %415 = vmatprep.subr.bf16.mxu0 0
      %416 = vmatpush1.bf16.msra.mxu0 0
      %417 = vmatprep.subr.bf16.mxu0 0
      %418 = vmatpush1.bf16.msra.mxu0 0
      %419 = vmatprep.subr.bf16.mxu0 0
      %420 = vmatpush1.bf16.msra.mxu0 0
      %421 = vmatprep.subr.bf16.mxu0 0
      %422 = vmatpush1.bf16.msra.mxu0 0
      %423 = vmatprep.subr.bf16.mxu0 0
      %424 = vmatpush1.bf16.msra.mxu0 0
      %425 = vmatprep.mubr.bf16.mxu0 0
      %426 = vmatmul.mubr.bf16.gmra.mrb[0].mxu0 %v260
      %v427 = vpop.f32.mrb[0].mxu0
      %v428 = vadd.f32 0.0, %v427
      %v429 = vpop.f32.mrb[0].mxu0
      %v430 = vpop.f32.mrb[0].mxu0
      %v431 = vadd.f32 0.0, %v430
      %v432 = vpop.f32.mrb[0].mxu0
      %433 = vdwg.mxu0
      %v436 = vunpack.c.l.b16 %v308
      %v437 = vunpack.c.l.b16 %v309
      %v438 = vpack.c.b16 %v437, %v436
      %v456 = vunpack.c.l.b16 %v312
      %v457 = vunpack.c.l.b16 %v313
      %v458 = vunpack.c.l.b16 %v314
      %v459 = vunpack.c.l.b16 %v315
      %v460 = vunpack.c.l.b16 %v316
      %v461 = vunpack.c.l.b16 %v317
      %v462 = vunpack.c.l.b16 %v318
      %v463 = vunpack.c.l.b16 %v319
      %v464 = vunpack.c.l.b16 %v320
      %v465 = vunpack.c.l.b16 %v321
      %v466 = vunpack.c.l.b16 %v322
      %v467 = vunpack.c.l.b16 %v323
      %v468 = vunpack.c.l.b16 %v324
      %v469 = vunpack.c.l.b16 %v325
      %v470 = vunpack.c.l.b16 %v326
      %v471 = vunpack.c.l.b16 %v327
      %v472 = vpack.c.b16 %v457, %v456
      %v473 = vpack.c.b16 %v459, %v458
      %v474 = vpack.c.b16 %v461, %v460
      %v475 = vpack.c.b16 %v463, %v462
      %v476 = vpack.c.b16 %v465, %v464
      %v477 = vpack.c.b16 %v467, %v466
      %v478 = vpack.c.b16 %v469, %v468
      %v479 = vpack.c.b16 %v471, %v470
      %488 = vmatprep.subr.bf16.mxu0 0
      %489 = vmatpush1.bf16.msra.mxu0 %v472
      %490 = vmatprep.subr.bf16.mxu0 0
      %491 = vmatpush1.bf16.msra.mxu0 %v473
      %492 = vmatprep.subr.bf16.mxu0 0
      %493 = vmatpush1.bf16.msra.mxu0 %v474
      %494 = vmatprep.subr.bf16.mxu0 0
      %495 = vmatpush1.bf16.msra.mxu0 %v475
      %496 = vmatprep.subr.bf16.mxu0 0
      %497 = vmatpush1.bf16.msra.mxu0 %v476
      %498 = vmatprep.subr.bf16.mxu0 0
      %499 = vmatpush1.bf16.msra.mxu0 %v477
      %500 = vmatprep.subr.bf16.mxu0 0
      %501 = vmatpush1.bf16.msra.mxu0 %v478
      %502 = vmatprep.subr.bf16.mxu0 0
      %503 = vmatpush1.bf16.msra.mxu0 %v479
      %504 = vmatprep.subr.bf16.mxu0 0
      %505 = vmatpush1.bf16.msra.mxu0 0
      %506 = vmatprep.subr.bf16.mxu0 0
      %507 = vmatpush1.bf16.msra.mxu0 0
      %508 = vmatprep.subr.bf16.mxu0 0
      %509 = vmatpush1.bf16.msra.mxu0 0
      %510 = vmatprep.subr.bf16.mxu0 0
      %511 = vmatpush1.bf16.msra.mxu0 0
      %512 = vmatprep.subr.bf16.mxu0 0
      %513 = vmatpush1.bf16.msra.mxu0 0
      %514 = vmatprep.subr.bf16.mxu0 0
      %515 = vmatpush1.bf16.msra.mxu0 0
      %516 = vmatprep.subr.bf16.mxu0 0
      %517 = vmatpush1.bf16.msra.mxu0 0
      %518 = vmatprep.subr.bf16.mxu0 0
      %519 = vmatpush1.bf16.msra.mxu0 0
      %520 = vmatprep.mubr.bf16.mxu0 0
      %521 = vmatmul.mubr.bf16.gmra.mrb[0].mxu0 %v438
      %v522 = vpop.f32.mrb[0].mxu0
      %v523 = vadd.f32 %v428, %v522
      %v524 = vpop.f32.mrb[0].mxu0
      %v525 = vpop.f32.mrb[0].mxu0
      %v526 = vadd.f32 %v431, %v525
      %v527 = vpop.f32.mrb[0].mxu0
      %528 = vdwg.mxu0
      %s529 = scalar_lea.vmem %s3, 128
      %v530 = vld [vmem:[%s529] sm:$0xf]
      %v531 = vld [vmem:[%s529 + $0x4] sm:$0xf]
      %v532 = vld [vmem:[%s529 + $0x8] sm:$0xf]
      %v533 = vld [vmem:[%s529 + $0xc] sm:$0xf]
      %v534 = vld [vmem:[%s529 + $0x10] sm:$0xf]
      %v535 = vld [vmem:[%s529 + $0x14] sm:$0xf]
      %v536 = vld [vmem:[%s529 + $0x18] sm:$0xf]
      %v537 = vld [vmem:[%s529 + $0x1c] sm:$0xf]
      %v538 = vld [vmem:[%s529 + $0x20] sm:$0xf]
      %v539 = vld [vmem:[%s529 + $0x24] sm:$0xf]
      %v540 = vld [vmem:[%s529 + $0x28] sm:$0xf]
      %v541 = vld [vmem:[%s529 + $0x2c] sm:$0xf]
      %v542 = vld [vmem:[%s529 + $0x30] sm:$0xf]
      %v543 = vld [vmem:[%s529 + $0x34] sm:$0xf]
      %v544 = vld [vmem:[%s529 + $0x38] sm:$0xf]
      %v545 = vld [vmem:[%s529 + $0x3c] sm:$0xf]
      %v548 = vunpack.c.l.b16 %v310
      %v549 = vunpack.c.l.b16 %v311
      %v550 = vpack.c.b16 %v437, %v548
      %v551 = vpack.c.b16 %v549, %v549
      %vm552 = vcmask 1046528
      %v553 = vrot.slane %v550, 1
      %v554 = vrot.slane %v551, 1
      %v555 = vsel %vm552, %v553, %v554
      %v573 = vunpack.c.l.b16 %v530
      %v574 = vunpack.c.l.b16 %v531
      %v575 = vunpack.c.l.b16 %v532
      %v576 = vunpack.c.l.b16 %v533
      %v577 = vunpack.c.l.b16 %v534
      %v578 = vunpack.c.l.b16 %v535
      %v579 = vunpack.c.l.b16 %v536
      %v580 = vunpack.c.l.b16 %v537
      %v581 = vunpack.c.l.b16 %v538
      %v582 = vunpack.c.l.b16 %v539
      %v583 = vunpack.c.l.b16 %v540
      %v584 = vunpack.c.l.b16 %v541
      %v585 = vunpack.c.l.b16 %v542
      %v586 = vunpack.c.l.b16 %v543
      %v587 = vunpack.c.l.b16 %v544
      %v588 = vunpack.c.l.b16 %v545
      %v589 = vpack.c.b16 %v574, %v573
      %v590 = vpack.c.b16 %v576, %v575
      %v591 = vpack.c.b16 %v578, %v577
      %v592 = vpack.c.b16 %v580, %v579
      %v593 = vpack.c.b16 %v582, %v581
      %v594 = vpack.c.b16 %v584, %v583
      %v595 = vpack.c.b16 %v586, %v585
      %v596 = vpack.c.b16 %v588, %v587
      %605 = vmatprep.subr.bf16.mxu0 0
      %606 = vmatpush1.bf16.msra.mxu0 %v589
      %607 = vmatprep.subr.bf16.mxu0 0
      %608 = vmatpush1.bf16.msra.mxu0 %v590
      %609 = vmatprep.subr.bf16.mxu0 0
      %610 = vmatpush1.bf16.msra.mxu0 %v591
      %611 = vmatprep.subr.bf16.mxu0 0
      %612 = vmatpush1.bf16.msra.mxu0 %v592
      %613 = vmatprep.subr.bf16.mxu0 0
      %614 = vmatpush1.bf16.msra.mxu0 %v593
      %615 = vmatprep.subr.bf16.mxu0 0
      %616 = vmatpush1.bf16.msra.mxu0 %v594
      %617 = vmatprep.subr.bf16.mxu0 0
      %618 = vmatpush1.bf16.msra.mxu0 %v595
      %619 = vmatprep.subr.bf16.mxu0 0
      %620 = vmatpush1.bf16.msra.mxu0 %v596
      %621 = vmatprep.subr.bf16.mxu0 0
      %622 = vmatpush1.bf16.msra.mxu0 0
      %623 = vmatprep.subr.bf16.mxu0 0
      %624 = vmatpush1.bf16.msra.mxu0 0
      %625 = vmatprep.subr.bf16.mxu0 0
      %626 = vmatpush1.bf16.msra.mxu0 0
      %627 = vmatprep.subr.bf16.mxu0 0
      %628 = vmatpush1.bf16.msra.mxu0 0
      %629 = vmatprep.subr.bf16.mxu0 0
      %630 = vmatpush1.bf16.msra.mxu0 0
      %631 = vmatprep.subr.bf16.mxu0 0
      %632 = vmatpush1.bf16.msra.mxu0 0
      %633 = vmatprep.subr.bf16.mxu0 0
      %634 = vmatpush1.bf16.msra.mxu0 0
      %635 = vmatprep.subr.bf16.mxu0 0
      %636 = vmatpush1.bf16.msra.mxu0 0
      %637 = vmatprep.mubr.bf16.mxu0 0
      %638 = vmatmul.mubr.bf16.gmra.mrb[0].mxu0 %v555
      %v639 = vpop.f32.mrb[0].mxu0
      %v640 = vadd.f32 0.0, %v639
      %v641 = vpop.f32.mrb[0].mxu0
      %v642 = vpop.f32.mrb[0].mxu0
      %v643 = vadd.f32 0.0, %v642
      %v644 = vpop.f32.mrb[0].mxu0
      %645 = vdwg.mxu0
      %v646 = vadd.f32 %v523, %v640
      %v647 = vadd.f32 %v526, %v643
      %v648 = vpack.c.bf16 %v647, %v646
      %v650 = vunpack.c.l.b16 %v648
      %v651 = vunpack.c.h.b16 %v648
      %v652 = vpack.c.b16 %v650, %v650
      %v653 = vpack.c.b16 %v651, %v651
      %656 = vst [vmem:[%s231] sm:$0xf] %v652
      %657 = vst [vmem:[%s231 + $0x4] sm:$0xf] %v653
      %v658 = vadd.f32 %v646, %v647
      %v659 = vrot.slane %v658, 4
      %v660 = vadd.f32 %v658, %v659
      %v661 = vrot.slane %v660, 2
      %v662 = vadd.f32 %v660, %v661
      %v663 = vrot.slane %v662, 1
      %v664 = vadd.f32 %v662, %v663
      %v665 = vmul.f32 %v646, %v646
      %v666 = vmul.f32 %v647, %v647
      %v667 = vadd.f32 %v665, %v666
      %v668 = vrot.slane %v667, 4
      %v669 = vadd.f32 %v667, %v668
      %v670 = vrot.slane %v669, 2
      %v671 = vadd.f32 %v669, %v670
      %v672 = vrot.slane %v671, 1
      %v673 = vadd.f32 %v671, %v672
      %vm674 = vcmask 1040384
      %v675 = vsel %vm674, %v664, %v673
      %676 = vst [vmem:[%s235] sm:$0x3] %v675
      %p677 = scmp.lt.s32.totalorder %s17, 1
      %s678 = scalar_select %p677, %s17, 1
      %s679 = smul.addr %s678, 2
      %s680 = smul.addr %s679, 4
      %s681 = scalar_lea.vmem %s4, %s680
      %p682 = scmp.lt.s32.totalorder %s17, 1
      %s683 = scalar_select %p682, %s17, 1
      %s684 = smul.addr %s683, 2
      %s685 = scalar_lea.vmem %s5, %s684
      // Predicated region
      $region37: #{conv_block_forward.4} parent=35 // pred_check
        %p686 = pneg %p124
      $region38: #{conv_block_forward.4} parent=35 // pred_check_branch
        %688 = sbr.rel (%p686) target = $region40
      $region39: #{conv_block_forward.4} parent=35 // pred_region
        _
      $region40: #{conv_block_forward.4} parent=35 // pred_fallthru
        _
      // Predicated region
      $region41: #{conv_block_forward.4} parent=35 // pred_check
        %p689 = pneg %p150
      $region42: #{conv_block_forward.4} parent=35 // pred_check_branch
        %691 = sbr.rel (%p689) target = $region44
      $region43: #{conv_block_forward.4} parent=35 // pred_region
        _
      $region44: #{conv_block_forward.4} parent=35 // pred_fallthru
        _
    $region36: #{conv_block_forward.4} parent=5 // pred_fallthru
      _
    %p692 = scmp.le.s32.totalorder 2, %s12
    // Predicated region
    $region45: #{conv_block_forward.4} parent=5 // pred_check
      %p693 = pneg %p692
    $region46: #{conv_block_forward.4} parent=5 // pred_check_branch
      %695 = sbr.rel (%p693) target = $region48
    $region47: #{conv_block_forward.4} parent=5 // pred_region
      %s696 = ssub.s32 %s12, 2
      // Predicated region
      $region49: #{conv_block_forward.4} parent=47 // pred_check
        %p697 = pneg %p130
      $region50: #{conv_block_forward.4} parent=47 // pred_check_branch
        %699 = sbr.rel (%p697) target = $region52
      $region51: #{conv_block_forward.4} parent=47 // pred_region
        %p700 = scmp.lt.s32.totalorder %s18, 1
        %s701 = scalar_select %p700, %s18, 1
        %s702 = smul.addr %s701, 2
        %s703 = smul.addr %s702, 4
        %s704 = scalar_lea.vmem %s4, %s703
      $region52: #{conv_block_forward.4} parent=47 // pred_fallthru
        _
      // Predicated region
      $region53: #{conv_block_forward.4} parent=47 // pred_check
        %p705 = pneg %p156
      $region54: #{conv_block_forward.4} parent=47 // pred_check_branch
        %707 = sbr.rel (%p705) target = $region56
      $region55: #{conv_block_forward.4} parent=47 // pred_region
        %p708 = scmp.lt.s32.totalorder %s18, 1
        %s709 = scalar_select %p708, %s18, 1
        %s710 = smul.addr %s709, 2
        %s711 = scalar_lea.vmem %s5, %s710
      $region56: #{conv_block_forward.4} parent=47 // pred_fallthru
        _
    $region48: #{conv_block_forward.4} parent=5 // pred_fallthru
      _
  $region6: #{conv_block_forward.4} parent=0 // loop_footer
    %s16 = sadd.s32 1, %s12
  $region7: #{conv_block_forward.4} parent=0 // loop_footer_branch
    %11 = sbr.rel target = $region3
  $region8: #{conv_block_forward.4} parent=0 // loop_exit
    _

</llo_original>
